<compile_context>
chip_gen: v5e
topology: v5e:2x2
jax: 0.10.0
libtpu: 0.0.40
codegen_flags: <defaults>
</compile_context>

<pallas_src>
import functools

import jax
import jax.numpy as jnp
from jax.experimental import pallas as pl
from jax.experimental.pallas import tpu as pltpu


def _round_up(x, m):
    return ((x + m - 1) // m) * m


def _sublane_pack(dtype):
    # sublane packing: 8 rows for 4-byte, 16 for 2-byte, 32 for 1-byte dtypes
    return {4: 8, 2: 16, 1: 32}[jnp.dtype(dtype).itemsize]


def _vmem_capacity_bytes():
    try:
        return int(pltpu.get_tpu_info().vmem_capacity_bytes)
    except Exception:
        return 64 * 1024 * 1024  # conservative default (v7x per-TC VMEM)


def prepare_weights(w_embed, w_recon):
    """One-time weight prep (transpose + pad s_embed_dim to x128). Cache the result.

    w_embed : [s_embed_dim, obs_dim]   (nn.Linear(obs_dim, s_embed_dim).weight)
    w_recon : [obs_dim, s_embed_dim]   (nn.Linear(s_embed_dim, obs_dim).weight)
    returns : (w1t [obs_dim, s_embed_p], w2t [s_embed_p, obs_dim])
    """
    s_embed_dim, obs_dim = w_embed.shape
    assert w_recon.shape == (obs_dim, s_embed_dim)
    s_embed_p = _round_up(s_embed_dim, 128)
    w1t = w_embed.T                      # (obs_dim, s_embed_dim)
    w2t = w_recon.T                      # (s_embed_dim, obs_dim)
    if s_embed_p != s_embed_dim:
        # Zero-padded embed columns give tanh(0)=0, and the matching zero rows of w2t
        # contribute nothing to the second matmul -> math unchanged.
        w1t = jnp.pad(w1t, ((0, 0), (0, s_embed_p - s_embed_dim)))
        w2t = jnp.pad(w2t, ((0, s_embed_p - s_embed_dim), (0, 0)))
    return w1t, w2t


def _autoencoder_kernel(x_ref, w1t_ref, w2t_ref, y_ref, *, discrete: bool, precision):
    """One batch tile of the autoencoder forward.

    x_ref  : (tm, obs_dim)        VMEM, native dtype
    w1t_ref: (obs_dim, s_embed_p) VMEM  (embed weight, pre-transposed, zero-padded cols)
    w2t_ref: (s_embed_p, obs_dim) VMEM  (recon weight, pre-transposed, zero-padded rows)
    y_ref  : (tm, obs_dim)        VMEM
    """
    x = x_ref[...]
    w1t = w1t_ref[...]
    w2t = w2t_ref[...]

    # Linear(obs_dim -> s_embed_dim) + tanh. MXU matmul, f32 accumulate, f32 tanh (EUP).
    h = jnp.tanh(jnp.dot(x, w1t, preferred_element_type=jnp.float32, precision=precision))

    # Linear(s_embed_dim -> obs_dim). Cast h back to the weight dtype so the MXU stays on
    # its native path for bf16 weights; accumulation again in f32.
    logits = jnp.dot(h.astype(w2t.dtype), w2t,
                     preferred_element_type=jnp.float32, precision=precision)

    if discrete:
        # Numerically stable log-softmax over the (unpadded) obs axis; exp/log on EUP.
        m = jnp.max(logits, axis=-1, keepdims=True)
        lse = m + jnp.log(jnp.sum(jnp.exp(logits - m), axis=-1, keepdims=True))
        out = logits - lse
    else:
        out = logits

    y_ref[...] = out.astype(y_ref.dtype)


def state_autoencoder_forward(state_x, w_embed=None, w_recon=None, *,
                              state_space_type="discrete", tm=None,
                              prepared_weights=None):
    """Pallas-backed forward of StateAutoEncoder.

    state_x : [B, obs_dim]
    w_embed : [s_embed_dim, obs_dim]   (ignored if prepared_weights given)
    w_recon : [obs_dim, s_embed_dim]   (ignored if prepared_weights given)
    prepared_weights : optional cached output of prepare_weights(w_embed, w_recon)
    returns : [B, obs_dim]
    """
    B, obs_dim = state_x.shape
    if prepared_weights is None:
        prepared_weights = prepare_weights(w_embed, w_recon)
    w1t, w2t = prepared_weights
    assert w1t.shape[0] == obs_dim
    s_embed_p = w1t.shape[1]
    assert w2t.shape == (s_embed_p, obs_dim)

    discrete = state_space_type == "discrete"
    dtype = state_x.dtype
    itemsize = jnp.dtype(dtype).itemsize
    pack = _sublane_pack(dtype)

    vmem_cap = _vmem_capacity_bytes()

    # VMEM footprint model:
    #   per batch-row: double-buffered x + y tiles (native dtype) + f32 h + f32 logits/out
    per_row = 4 * itemsize * obs_dim + 4 * s_embed_p + 8 * obs_dim
    #   resident weights (upper bound: assume 2 buffers even if single-buffering succeeds)
    fixed = 2 * 2 * obs_dim * s_embed_p * itemsize

    if tm is None:
        budget = int(0.4 * vmem_cap)                       # headroom for compiler scratch
        cap = max(pack, ((max(budget - fixed, per_row)) // per_row) // pack * pack)
        cap = min(cap, 2048)                               # diminishing returns past ~1-2K rows
        target = _round_up(B, pack)
        if B >= 1024:
            # Give the megacore ("parallel" batch axis, >=2 TCs on v7x) at least 2 steps.
            target = _round_up(-(-B // 2), pack)
        tm = max(pack, min(cap, target))
    else:
        tm = max(pack, _round_up(tm, pack))

    b_p = _round_up(B, tm)
    x = state_x
    if b_p != B:
        x = jnp.pad(x, ((0, b_p - B), (0, 0)))

    vmem_needed = fixed + tm * per_row
    vmem_limit = int(min(max(32 * 1024 * 1024, 2 * vmem_needed),
                         max(int(0.75 * vmem_cap), vmem_needed + (1 << 20))))

    precision = (jax.lax.Precision.HIGHEST if dtype == jnp.float32
                 else jax.lax.Precision.DEFAULT)
    kernel = functools.partial(_autoencoder_kernel, discrete=discrete, precision=precision)

    grid = (b_p // tm,)
    flops = 4 * b_p * obs_dim * s_embed_p                  # two matmuls (2*M*N*K each)
    transcendentals = b_p * s_embed_p + (2 * b_p * obs_dim if discrete else 0)
    bytes_accessed = itemsize * (2 * b_p * obs_dim + 2 * obs_dim * s_embed_p)

    def run(single_buffer_weights):
        wkw = dict(pipeline_mode=pl.Buffered(1)) if single_buffer_weights else {}
        call = pl.pallas_call(
            kernel,
            out_shape=jax.ShapeDtypeStruct((b_p, obs_dim), dtype),
            grid_spec=pl.GridSpec(
                grid=grid,
                in_specs=[
                    # batch tile of inputs (feature axis kept at native width)
                    pl.BlockSpec((tm, obs_dim), lambda i: (i, 0)),
                    # full weight matrices, resident for every tile (constant index_map)
                    pl.BlockSpec((obs_dim, s_embed_p), lambda i: (0, 0), **wkw),
                    pl.BlockSpec((s_embed_p, obs_dim), lambda i: (0, 0), **wkw),
                ],
                out_specs=pl.BlockSpec((tm, obs_dim), lambda i: (i, 0)),
            ),
            compiler_params=pltpu.CompilerParams(
                dimension_semantics=("parallel",),
                vmem_limit_bytes=vmem_limit,
            ),
            cost_estimate=pl.CostEstimate(
                flops=flops,
                transcendentals=transcendentals,
                bytes_accessed=bytes_accessed,
            ),
        )
        return call(x, w1t, w2t)

    try:
        out = run(True)                 # single-buffered resident weights
    except Exception:
        out = run(False)                # fallback if pipeline_mode=Buffered(1) unsupported

    if b_p != B:
        out = out[:B]
    return out


def _reference_forward(state_x, w_embed, w_recon, state_space_type):
    hi = jax.lax.Precision.HIGHEST
    h = jnp.tanh(jnp.dot(state_x, w_embed.T, precision=hi))
    y = jnp.dot(h, w_recon.T, precision=hi)
    if state_space_type == "discrete":
        y = jax.nn.log_softmax(y, axis=-1)
    return y


if __name__ == "__main__":
    # Small shapes consistent with the module: batch=32, obs_dim=16, s_embed_dim=8
    B, OBS_DIM, S_EMBED_DIM = 32, 16, 8

    key = jax.random.PRNGKey(0)
    kx, k1, k2 = jax.random.split(key, 3)

    # Deterministic parameter init mimicking nn.Linear default (uniform +-1/sqrt(fan_in))
    bound1 = 1.0 / (OBS_DIM ** 0.5)
    bound2 = 1.0 / (S_EMBED_DIM ** 0.5)
    w_embed = jax.random.uniform(k1, (S_EMBED_DIM, OBS_DIM),
                                 minval=-bound1, maxval=bound1, dtype=jnp.float32)
    w_recon = jax.random.uniform(k2, (OBS_DIM, S_EMBED_DIM),
                                 minval=-bound2, maxval=bound2, dtype=jnp.float32)
    state_x = jax.random.normal(kx, (B, OBS_DIM), dtype=jnp.float32)

    # Hoisted weight prep: done once, reused for every forward call.
    prepared = prepare_weights(w_embed, w_recon)

    # Exercise both the LogSoftmax (discrete) and Identity (continuous) paths.
    for space in ("discrete", "continuous"):
        y = state_autoencoder_forward(state_x, w_embed, w_recon,
                                      state_space_type=space,
                                      prepared_weights=prepared)
        y = jax.block_until_ready(y)
        y_ref = _reference_forward(state_x, w_embed, w_recon, space)
        assert y.shape == (B, OBS_DIM)
        assert jnp.allclose(y, y_ref, atol=1e-4, rtol=1e-4), space

    print("KERNEL_OK")
</pallas_src>

<mosaic_0001>
module attributes {stable_mosaic.version = 11 : i64} {
  func.func @_autoencoder_kernel(%arg0: i32, %arg1: memref<32x16xf32, #tpu.memory_space<vmem>>, %arg2: memref<16x128xf32, #tpu.memory_space<vmem>>, %arg3: memref<128x16xf32, #tpu.memory_space<vmem>>, %arg4: memref<32x16xf32, #tpu.memory_space<vmem>>) attributes {dimension_semantics = [#tpu.dimension_semantics<parallel>], iteration_bounds = array<i64: 1>, scalar_prefetch = 0 : i64, scratch_operands = 0 : i64, tpu.core_type = #tpu.core_type<tc>, window_params = [{transform_indices = @transform_0, window_bounds = array<i64: 32, 16>}, {pipeline_mode = #tpu.pipeline_mode<synchronous>, transform_indices = @transform_1, window_bounds = array<i64: 16, 128>}, {pipeline_mode = #tpu.pipeline_mode<synchronous>, transform_indices = @transform_2, window_bounds = array<i64: 128, 16>}, {transform_indices = @transform_3, window_bounds = array<i64: 32, 16>}]} {
    %c0 = arith.constant 0 : index
    %c0_0 = arith.constant 0 : index
    %0 = vector.load %arg1[%c0, %c0_0] : memref<32x16xf32, #tpu.memory_space<vmem>>, vector<32x16xf32>
    %c0_1 = arith.constant 0 : index
    %c0_2 = arith.constant 0 : index
    %1 = vector.load %arg2[%c0_1, %c0_2] : memref<16x128xf32, #tpu.memory_space<vmem>>, vector<16x128xf32>
    %c0_3 = arith.constant 0 : index
    %c0_4 = arith.constant 0 : index
    %2 = vector.load %arg3[%c0_3, %c0_4] : memref<128x16xf32, #tpu.memory_space<vmem>>, vector<128x16xf32>
    %cst = arith.constant dense<0.000000e+00> : vector<32x128xf32>
    %3 = tpu.matmul %0, %1, %cst {dimension_numbers = #tpu.dot_dimension_numbers<[1], [0], [0], [1], [0, 0, 1, 1], [], []>, precision = #tpu.contract_precision<fp32>} : vector<32x16xf32>, vector<16x128xf32>, vector<32x128xf32> -> vector<32x128xf32>
    %4 = math.tanh %3 : vector<32x128xf32>
    %cst_5 = arith.constant dense<0.000000e+00> : vector<32x16xf32>
    %5 = tpu.matmul %4, %2, %cst_5 {dimension_numbers = #tpu.dot_dimension_numbers<[1], [0], [0], [1], [0, 0, 1, 1], [], []>, precision = #tpu.contract_precision<fp32>} : vector<32x128xf32>, vector<128x16xf32>, vector<32x16xf32> -> vector<32x16xf32>
    %cst_6 = arith.constant dense<0xFF800000> : vector<32xf32>
    %6 = vector.multi_reduction <maximumf>, %5, %cst_6 [1] : vector<32x16xf32> to vector<32xf32>
    %7 = vector.shape_cast %6 : vector<32xf32> to vector<32x1xf32>
    %8 = vector.broadcast %7 : vector<32x1xf32> to vector<32x16xf32>
    %9 = arith.subf %5, %8 : vector<32x16xf32>
    %10 = math.exp %9 : vector<32x16xf32>
    %cst_7 = arith.constant dense<0.000000e+00> : vector<32xf32>
    %11 = vector.multi_reduction <add>, %10, %cst_7 [1] : vector<32x16xf32> to vector<32xf32>
    %12 = vector.shape_cast %11 : vector<32xf32> to vector<32x1xf32>
    %13 = math.log %12 : vector<32x1xf32>
    %14 = arith.addf %7, %13 : vector<32x1xf32>
    %15 = vector.broadcast %14 : vector<32x1xf32> to vector<32x16xf32>
    %16 = arith.subf %5, %15 : vector<32x16xf32>
    %c0_8 = arith.constant 0 : index
    %c0_9 = arith.constant 0 : index
    %17 = vector.load %arg4[%c0_8, %c0_9] : memref<32x16xf32, #tpu.memory_space<vmem>>, vector<32x16xf32>
    tpu.vector_store %arg4[%c0_8, %c0_9], %16 {strides = array<i32>} : memref<32x16xf32, #tpu.memory_space<vmem>>, vector<32x16xf32>,
    return
  }
  func.func @transform_0(%arg0: i32) -> (i32, i32) {
    %c0_i32 = arith.constant 0 : i32
    %c0_i32_0 = arith.constant 0 : i32
    return %arg0, %c0_i32 : i32, i32
  }
  func.func @transform_1(%arg0: i32) -> (i32, i32) {
    %c0_i32 = arith.constant 0 : i32
    %c0_i32_0 = arith.constant 0 : i32
    %c0_i32_1 = arith.constant 0 : i32
    return %c0_i32, %c0_i32_0 : i32, i32
  }
  func.func @transform_2(%arg0: i32) -> (i32, i32) {
    %c0_i32 = arith.constant 0 : i32
    %c0_i32_0 = arith.constant 0 : i32
    %c0_i32_1 = arith.constant 0 : i32
    return %c0_i32, %c0_i32_0 : i32, i32
  }
  func.func @transform_3(%arg0: i32) -> (i32, i32) {
    %c0_i32 = arith.constant 0 : i32
    %c0_i32_0 = arith.constant 0 : i32
    return %arg0, %c0_i32 : i32, i32
  }
}

module attributes {stable_mosaic.version = 11 : i64} {
  func.func @_autoencoder_kernel(%arg0: i32, %arg1: memref<32x16xf32, #tpu.memory_space<vmem>>, %arg2: memref<16x128xf32, #tpu.memory_space<vmem>>, %arg3: memref<128x16xf32, #tpu.memory_space<vmem>>, %arg4: memref<32x16xf32, #tpu.memory_space<vmem>>) attributes {dimension_semantics = [#tpu.dimension_semantics<parallel>], iteration_bounds = array<i64: 1>, scalar_prefetch = 0 : i64, scratch_operands = 0 : i64, tpu.core_type = #tpu.core_type<tc>, window_params = [{transform_indices = @transform_0, window_bounds = array<i64: 32, 16>}, {pipeline_mode = #tpu.pipeline_mode<synchronous>, transform_indices = @transform_1, window_bounds = array<i64: 16, 128>}, {pipeline_mode = #tpu.pipeline_mode<synchronous>, transform_indices = @transform_2, window_bounds = array<i64: 128, 16>}, {transform_indices = @transform_3, window_bounds = array<i64: 32, 16>}]} {
    %c0 = arith.constant 0 : index
    %c0_0 = arith.constant 0 : index
    %0 = vector.load %arg1[%c0, %c0_0] : memref<32x16xf32, #tpu.memory_space<vmem>>, vector<32x16xf32>
    %c0_1 = arith.constant 0 : index
    %c0_2 = arith.constant 0 : index
    %1 = vector.load %arg2[%c0_1, %c0_2] : memref<16x128xf32, #tpu.memory_space<vmem>>, vector<16x128xf32>
    %c0_3 = arith.constant 0 : index
    %c0_4 = arith.constant 0 : index
    %2 = vector.load %arg3[%c0_3, %c0_4] : memref<128x16xf32, #tpu.memory_space<vmem>>, vector<128x16xf32>
    %cst = arith.constant dense<0.000000e+00> : vector<32x128xf32>
    %3 = tpu.matmul %0, %1, %cst {dimension_numbers = #tpu.dot_dimension_numbers<[1], [0], [0], [1], [0, 0, 1, 1], [], []>, precision = #tpu.contract_precision<fp32>} : vector<32x16xf32>, vector<16x128xf32>, vector<32x128xf32> -> vector<32x128xf32>
    %4 = math.tanh %3 : vector<32x128xf32>
    %cst_5 = arith.constant dense<0.000000e+00> : vector<32x16xf32>
    %5 = tpu.matmul %4, %2, %cst_5 {dimension_numbers = #tpu.dot_dimension_numbers<[1], [0], [0], [1], [0, 0, 1, 1], [], []>, precision = #tpu.contract_precision<fp32>} : vector<32x128xf32>, vector<128x16xf32>, vector<32x16xf32> -> vector<32x16xf32>
    %cst_6 = arith.constant dense<0xFF800000> : vector<32xf32>
    %6 = vector.multi_reduction <maximumf>, %5, %cst_6 [1] : vector<32x16xf32> to vector<32xf32>
    %7 = vector.shape_cast %6 : vector<32xf32> to vector<32x1xf32>
    %8 = vector.broadcast %7 : vector<32x1xf32> to vector<32x16xf32>
    %9 = arith.subf %5, %8 : vector<32x16xf32>
    %10 = math.exp %9 : vector<32x16xf32>
    %cst_7 = arith.constant dense<0.000000e+00> : vector<32xf32>
    %11 = vector.multi_reduction <add>, %10, %cst_7 [1] : vector<32x16xf32> to vector<32xf32>
    %12 = vector.shape_cast %11 : vector<32xf32> to vector<32x1xf32>
    %13 = math.log %12 : vector<32x1xf32>
    %14 = arith.addf %7, %13 : vector<32x1xf32>
    %15 = vector.broadcast %14 : vector<32x1xf32> to vector<32x16xf32>
    %16 = arith.subf %5, %15 : vector<32x16xf32>
    %c0_8 = arith.constant 0 : index
    %c0_9 = arith.constant 0 : index
    %17 = vector.load %arg4[%c0_8, %c0_9] : memref<32x16xf32, #tpu.memory_space<vmem>>, vector<32x16xf32>
    tpu.vector_store %arg4[%c0_8, %c0_9], %16 {strides = array<i32>} : memref<32x16xf32, #tpu.memory_space<vmem>>, vector<32x16xf32>,
    return
  }
  func.func @transform_0(%arg0: i32) -> (i32, i32) {
    %c0_i32 = arith.constant 0 : i32
    %c0_i32_0 = arith.constant 0 : i32
    return %arg0, %c0_i32 : i32, i32
  }
  func.func @transform_1(%arg0: i32) -> (i32, i32) {
    %c0_i32 = arith.constant 0 : i32
    %c0_i32_0 = arith.constant 0 : i32
    %c0_i32_1 = arith.constant 0 : i32
    return %c0_i32, %c0_i32_0 : i32, i32
  }
  func.func @transform_2(%arg0: i32) -> (i32, i32) {
    %c0_i32 = arith.constant 0 : i32
    %c0_i32_0 = arith.constant 0 : i32
    %c0_i32_1 = arith.constant 0 : i32
    return %c0_i32, %c0_i32_0 : i32, i32
  }
  func.func @transform_3(%arg0: i32) -> (i32, i32) {
    %c0_i32 = arith.constant 0 : i32
    %c0_i32_0 = arith.constant 0 : i32
    return %arg0, %c0_i32 : i32, i32
  }
}

</mosaic_0001>

<llo_original>
// kernel: tpu_custom_call.1
$region0: #{tpu_custom_call.1}
  #allocation0 [shape = 'u32[]', space=smem, size = 0x4, offset = 0x4, fixed_abs, tag = 'smem constant byte address 0x4 - core index']
  #allocation1 [shape = 'u32[72,128]{1,0:T(1,128)}', space=vmem, size = 0x9000, scoped, tag = 'internal scratch']
  %s0 = inlined_call_operand.vmem [shape: f32[32,16], index: 0, kind: input, shape index: {}]
  %s1 = inlined_call_operand.vmem [shape: f32[16,128], index: 1, kind: input, shape index: {}]
  %s2 = inlined_call_operand.vmem [shape: f32[128,16], index: 2, kind: input, shape index: {}]
  %s3 = inlined_call_operand.vmem [shape: f32[32,16], index: 3, kind: output, shape index: {}]
  %s4 = sld [smem:[#allocation0]]
  $region22: #{tpu_custom_call.1} parent=0
    _
  %s6 = ssub.s32 1, %s4
  %s7 = scalar_select 0, %s6, %s4
  // Predicated region
  $region2: #{tpu_custom_call.1} parent=0 // pred_check
    _
  $region3: #{tpu_custom_call.1} parent=0 // pred_check_branch
    %9 = sbr.rel (0) target = $region5
  $region4: #{tpu_custom_call.1} parent=0 // pred_region
    _
  $region5: #{tpu_custom_call.1} parent=0 // pred_fallthru
    _
  // Predicated region
  $region6: #{tpu_custom_call.1} parent=0 // pred_check
    _
  $region7: #{tpu_custom_call.1} parent=0 // pred_check_branch
    %11 = sbr.rel (0) target = $region9
  $region8: #{tpu_custom_call.1} parent=0 // pred_region
    _
  $region9: #{tpu_custom_call.1} parent=0 // pred_fallthru
    _
  // Predicated region
  $region10: #{tpu_custom_call.1} parent=0 // pred_check
    _
  $region11: #{tpu_custom_call.1} parent=0 // pred_check_branch
    %13 = sbr.rel (0) target = $region13
  $region12: #{tpu_custom_call.1} parent=0 // pred_region
    _
  $region13: #{tpu_custom_call.1} parent=0 // pred_fallthru
    _
  %v14 = vld [vmem:[%s0] sm:$0xff]
  %v15 = vld [vmem:[%s0 + $0x8] sm:$0xff]
  %v16 = vld [vmem:[%s0 + $0x10] sm:$0xff]
  %v17 = vld [vmem:[%s0 + $0x18] sm:$0xff]
  %v18 = vld [vmem:[%s1] sm:$0xff]
  %v19 = vld [vmem:[%s1 + $0x8] sm:$0xff]
  %v20 = vld [vmem:[%s2] sm:$0xff]
  %v21 = vld [vmem:[%s2 + $0x8] sm:$0xff]
  %v22 = vld [vmem:[%s2 + $0x10] sm:$0xff]
  %v23 = vld [vmem:[%s2 + $0x18] sm:$0xff]
  %v24 = vld [vmem:[%s2 + $0x20] sm:$0xff]
  %v25 = vld [vmem:[%s2 + $0x28] sm:$0xff]
  %v26 = vld [vmem:[%s2 + $0x30] sm:$0xff]
  %v27 = vld [vmem:[%s2 + $0x38] sm:$0xff]
  %v28 = vld [vmem:[%s2 + $0x40] sm:$0xff]
  %v29 = vld [vmem:[%s2 + $0x48] sm:$0xff]
  %v30 = vld [vmem:[%s2 + $0x50] sm:$0xff]
  %v31 = vld [vmem:[%s2 + $0x58] sm:$0xff]
  %v32 = vld [vmem:[%s2 + $0x60] sm:$0xff]
  %v33 = vld [vmem:[%s2 + $0x68] sm:$0xff]
  %v34 = vld [vmem:[%s2 + $0x70] sm:$0xff]
  %v35 = vld [vmem:[%s2 + $0x78] sm:$0xff]
  %vm36 = vcmask 130048
  %v38 = vsel %vm36, %v14, 0
  %v41 = vsel %vm36, %v15, 0
  %v44 = vsel %vm36, %v16, 0
  %v47 = vsel %vm36, %v17, 0
  %49 = vmatpush.msra.mxu0 0.0
  %50 = vmatpush.msra.mxu0 0.0
  %51 = vmatpush.msra.mxu0 0.0
  %52 = vmatpush.msra.mxu0 0.0
  %53 = vmatpush.msra.mxu0 0.0
  %54 = vmatpush.msra.mxu0 0.0
  %55 = vmatpush.msra.mxu0 0.0
  %56 = vmatpush.msra.mxu0 0.0
  %57 = vmatpush.msra.mxu0 0.0
  %58 = vmatpush.msra.mxu0 0.0
  %59 = vmatpush.msra.mxu0 0.0
  %60 = vmatpush.msra.mxu0 0.0
  %61 = vmatpush.msra.mxu0 0.0
  %62 = vmatpush.msra.mxu0 0.0
  %v63 = vand.u32 %v19, 4294901760
  %64 = vmatpush.msra.mxu0 %v63
  %v65 = vand.u32 %v18, 4294901760
  %66 = vmatpush.msra.mxu0 %v65
  %v67 = vand.u32 %v38, 4294901760
  %v68 = vsub.f32 %v38, %v67
  %v69 = vand.u32 %v68, 4294901760
  %v70 = vsub.f32 %v68, %v69
  %v71 = vand.u32 %v70, 4294901760
  %72 = vmatmul.f32.gmra.mxu0 %v71
  %v73 = vpop.f32.mrf.mxu0
  %v74 = vadd.f32 0.0, %v73
  %v75 = vand.u32 %v41, 4294901760
  %v76 = vsub.f32 %v41, %v75
  %v77 = vand.u32 %v76, 4294901760
  %v78 = vsub.f32 %v76, %v77
  %v79 = vand.u32 %v78, 4294901760
  %80 = vmatmul.f32.gmra.mxu0 %v79
  %v81 = vpop.f32.mrf.mxu0
  %v82 = vadd.f32 0.0, %v81
  %v83 = vand.u32 %v44, 4294901760
  %v84 = vsub.f32 %v44, %v83
  %v85 = vand.u32 %v84, 4294901760
  %v86 = vsub.f32 %v84, %v85
  %v87 = vand.u32 %v86, 4294901760
  %88 = vmatmul.f32.gmra.mxu0 %v87
  %v89 = vpop.f32.mrf.mxu0
  %v90 = vadd.f32 0.0, %v89
  %v91 = vand.u32 %v47, 4294901760
  %v92 = vsub.f32 %v47, %v91
  %v93 = vand.u32 %v92, 4294901760
  %v94 = vsub.f32 %v92, %v93
  %v95 = vand.u32 %v94, 4294901760
  %96 = vmatmul.f32.gmra.mxu0 %v95
  %v97 = vpop.f32.mrf.mxu0
  %v98 = vadd.f32 0.0, %v97
  %99 = vdwg.mxu0
  %100 = vmatpush.msra.mxu0 0.0
  %101 = vmatpush.msra.mxu0 0.0
  %102 = vmatpush.msra.mxu0 0.0
  %103 = vmatpush.msra.mxu0 0.0
  %104 = vmatpush.msra.mxu0 0.0
  %105 = vmatpush.msra.mxu0 0.0
  %106 = vmatpush.msra.mxu0 0.0
  %107 = vmatpush.msra.mxu0 0.0
  %108 = vmatpush.msra.mxu0 0.0
  %109 = vmatpush.msra.mxu0 0.0
  %110 = vmatpush.msra.mxu0 0.0
  %111 = vmatpush.msra.mxu0 0.0
  %112 = vmatpush.msra.mxu0 0.0
  %113 = vmatpush.msra.mxu0 0.0
  %v114 = vand.u32 %v19, 4294901760
  %v115 = vsub.f32 %v19, %v114
  %v116 = vand.u32 %v115, 4294901760
  %v117 = vsub.f32 %v115, %v116
  %v118 = vand.u32 %v117, 4294901760
  %119 = vmatpush.msra.mxu0 %v118
  %v120 = vand.u32 %v18, 4294901760
  %v121 = vsub.f32 %v18, %v120
  %v122 = vand.u32 %v121, 4294901760
  %v123 = vsub.f32 %v121, %v122
  %v124 = vand.u32 %v123, 4294901760
  %125 = vmatpush.msra.mxu0 %v124
  %v126 = vand.u32 %v38, 4294901760
  %127 = vmatmul.f32.gmra.mxu0 %v126
  %v128 = vpop.f32.mrf.mxu0
  %v129 = vadd.f32 %v74, %v128
  %v130 = vand.u32 %v41, 4294901760
  %131 = vmatmul.f32.gmra.mxu0 %v130
  %v132 = vpop.f32.mrf.mxu0
  %v133 = vadd.f32 %v82, %v132
  %v134 = vand.u32 %v44, 4294901760
  %135 = vmatmul.f32.gmra.mxu0 %v134
  %v136 = vpop.f32.mrf.mxu0
  %v137 = vadd.f32 %v90, %v136
  %v138 = vand.u32 %v47, 4294901760
  %139 = vmatmul.f32.gmra.mxu0 %v138
  %v140 = vpop.f32.mrf.mxu0
  %v141 = vadd.f32 %v98, %v140
  %142 = vdwg.mxu0
  %143 = vmatpush.msra.mxu0 0.0
  %144 = vmatpush.msra.mxu0 0.0
  %145 = vmatpush.msra.mxu0 0.0
  %146 = vmatpush.msra.mxu0 0.0
  %147 = vmatpush.msra.mxu0 0.0
  %148 = vmatpush.msra.mxu0 0.0
  %149 = vmatpush.msra.mxu0 0.0
  %150 = vmatpush.msra.mxu0 0.0
  %151 = vmatpush.msra.mxu0 0.0
  %152 = vmatpush.msra.mxu0 0.0
  %153 = vmatpush.msra.mxu0 0.0
  %154 = vmatpush.msra.mxu0 0.0
  %155 = vmatpush.msra.mxu0 0.0
  %156 = vmatpush.msra.mxu0 0.0
  %v157 = vand.u32 %v19, 4294901760
  %v158 = vsub.f32 %v19, %v157
  %159 = vmatpush.msra.mxu0 %v158
  %v160 = vand.u32 %v18, 4294901760
  %v161 = vsub.f32 %v18, %v160
  %162 = vmatpush.msra.mxu0 %v161
  %v163 = vand.u32 %v38, 4294901760
  %v164 = vsub.f32 %v38, %v163
  %165 = vmatmul.f32.gmra.mxu0 %v164
  %v166 = vpop.f32.mrf.mxu0
  %v167 = vadd.f32 %v129, %v166
  %v168 = vand.u32 %v41, 4294901760
  %v169 = vsub.f32 %v41, %v168
  %170 = vmatmul.f32.gmra.mxu0 %v169
  %v171 = vpop.f32.mrf.mxu0
  %v172 = vadd.f32 %v133, %v171
  %v173 = vand.u32 %v44, 4294901760
  %v174 = vsub.f32 %v44, %v173
  %175 = vmatmul.f32.gmra.mxu0 %v174
  %v176 = vpop.f32.mrf.mxu0
  %v177 = vadd.f32 %v137, %v176
  %v178 = vand.u32 %v47, 4294901760
  %v179 = vsub.f32 %v47, %v178
  %180 = vmatmul.f32.gmra.mxu0 %v179
  %v181 = vpop.f32.mrf.mxu0
  %v182 = vadd.f32 %v141, %v181
  %183 = vdwg.mxu0
  %184 = vmatpush.msra.mxu0 0.0
  %185 = vmatpush.msra.mxu0 0.0
  %186 = vmatpush.msra.mxu0 0.0
  %187 = vmatpush.msra.mxu0 0.0
  %188 = vmatpush.msra.mxu0 0.0
  %189 = vmatpush.msra.mxu0 0.0
  %190 = vmatpush.msra.mxu0 0.0
  %191 = vmatpush.msra.mxu0 0.0
  %192 = vmatpush.msra.mxu0 0.0
  %193 = vmatpush.msra.mxu0 0.0
  %194 = vmatpush.msra.mxu0 0.0
  %195 = vmatpush.msra.mxu0 0.0
  %196 = vmatpush.msra.mxu0 0.0
  %197 = vmatpush.msra.mxu0 0.0
  %v198 = vand.u32 %v19, 4294901760
  %199 = vmatpush.msra.mxu0 %v198
  %v200 = vand.u32 %v18, 4294901760
  %201 = vmatpush.msra.mxu0 %v200
  %v202 = vand.u32 %v38, 4294901760
  %v203 = vsub.f32 %v38, %v202
  %v204 = vand.u32 %v203, 4294901760
  %205 = vmatmul.f32.gmra.mxu0 %v204
  %v206 = vpop.f32.mrf.mxu0
  %v207 = vadd.f32 %v167, %v206
  %v208 = vand.u32 %v41, 4294901760
  %v209 = vsub.f32 %v41, %v208
  %v210 = vand.u32 %v209, 4294901760
  %211 = vmatmul.f32.gmra.mxu0 %v210
  %v212 = vpop.f32.mrf.mxu0
  %v213 = vadd.f32 %v172, %v212
  %v214 = vand.u32 %v44, 4294901760
  %v215 = vsub.f32 %v44, %v214
  %v216 = vand.u32 %v215, 4294901760
  %217 = vmatmul.f32.gmra.mxu0 %v216
  %v218 = vpop.f32.mrf.mxu0
  %v219 = vadd.f32 %v177, %v218
  %v220 = vand.u32 %v47, 4294901760
  %v221 = vsub.f32 %v47, %v220
  %v222 = vand.u32 %v221, 4294901760
  %223 = vmatmul.f32.gmra.mxu0 %v222
  %v224 = vpop.f32.mrf.mxu0
  %v225 = vadd.f32 %v182, %v224
  %226 = vdwg.mxu0
  %227 = vmatpush.msra.mxu0 0.0
  %228 = vmatpush.msra.mxu0 0.0
  %229 = vmatpush.msra.mxu0 0.0
  %230 = vmatpush.msra.mxu0 0.0
  %231 = vmatpush.msra.mxu0 0.0
  %232 = vmatpush.msra.mxu0 0.0
  %233 = vmatpush.msra.mxu0 0.0
  %234 = vmatpush.msra.mxu0 0.0
  %235 = vmatpush.msra.mxu0 0.0
  %236 = vmatpush.msra.mxu0 0.0
  %237 = vmatpush.msra.mxu0 0.0
  %238 = vmatpush.msra.mxu0 0.0
  %239 = vmatpush.msra.mxu0 0.0
  %240 = vmatpush.msra.mxu0 0.0
  %v241 = vand.u32 %v19, 4294901760
  %v242 = vsub.f32 %v19, %v241
  %v243 = vand.u32 %v242, 4294901760
  %244 = vmatpush.msra.mxu0 %v243
  %v245 = vand.u32 %v18, 4294901760
  %v246 = vsub.f32 %v18, %v245
  %v247 = vand.u32 %v246, 4294901760
  %248 = vmatpush.msra.mxu0 %v247
  %v249 = vand.u32 %v38, 4294901760
  %250 = vmatmul.f32.gmra.mxu0 %v249
  %v251 = vpop.f32.mrf.mxu0
  %v252 = vadd.f32 %v207, %v251
  %v253 = vand.u32 %v41, 4294901760
  %254 = vmatmul.f32.gmra.mxu0 %v253
  %v255 = vpop.f32.mrf.mxu0
  %v256 = vadd.f32 %v213, %v255
  %v257 = vand.u32 %v44, 4294901760
  %258 = vmatmul.f32.gmra.mxu0 %v257
  %v259 = vpop.f32.mrf.mxu0
  %v260 = vadd.f32 %v219, %v259
  %v261 = vand.u32 %v47, 4294901760
  %262 = vmatmul.f32.gmra.mxu0 %v261
  %v263 = vpop.f32.mrf.mxu0
  %v264 = vadd.f32 %v225, %v263
  %265 = vdwg.mxu0
  %266 = vmatpush.msra.mxu0 0.0
  %267 = vmatpush.msra.mxu0 0.0
  %268 = vmatpush.msra.mxu0 0.0
  %269 = vmatpush.msra.mxu0 0.0
  %270 = vmatpush.msra.mxu0 0.0
  %271 = vmatpush.msra.mxu0 0.0
  %272 = vmatpush.msra.mxu0 0.0
  %273 = vmatpush.msra.mxu0 0.0
  %274 = vmatpush.msra.mxu0 0.0
  %275 = vmatpush.msra.mxu0 0.0
  %276 = vmatpush.msra.mxu0 0.0
  %277 = vmatpush.msra.mxu0 0.0
  %278 = vmatpush.msra.mxu0 0.0
  %279 = vmatpush.msra.mxu0 0.0
  %v280 = vand.u32 %v19, 4294901760
  %281 = vmatpush.msra.mxu0 %v280
  %v282 = vand.u32 %v18, 4294901760
  %283 = vmatpush.msra.mxu0 %v282
  %v284 = vand.u32 %v38, 4294901760
  %285 = vmatmul.f32.gmra.mxu0 %v284
  %v286 = vpop.f32.mrf.mxu0
  %v287 = vadd.f32 %v252, %v286
  %v288 = vand.u32 %v41, 4294901760
  %289 = vmatmul.f32.gmra.mxu0 %v288
  %v290 = vpop.f32.mrf.mxu0
  %v291 = vadd.f32 %v256, %v290
  %v292 = vand.u32 %v44, 4294901760
  %293 = vmatmul.f32.gmra.mxu0 %v292
  %v294 = vpop.f32.mrf.mxu0
  %v295 = vadd.f32 %v260, %v294
  %v296 = vand.u32 %v47, 4294901760
  %297 = vmatmul.f32.gmra.mxu0 %v296
  %v298 = vpop.f32.mrf.mxu0
  %v299 = vadd.f32 %v264, %v298
  %300 = vdwg.mxu0
  %v301 = vtanh.pop %v287
  %v302 = vtanh.pop %v291
  %v303 = vtanh.pop %v295
  %v304 = vtanh.pop %v299
  %v305 = vand.u32 %v35, 4294901760
  %306 = vmatpush.msra.mxu0 %v305
  %v307 = vand.u32 %v34, 4294901760
  %308 = vmatpush.msra.mxu0 %v307
  %v309 = vand.u32 %v33, 4294901760
  %310 = vmatpush.msra.mxu0 %v309
  %v311 = vand.u32 %v32, 4294901760
  %312 = vmatpush.msra.mxu0 %v311
  %v313 = vand.u32 %v31, 4294901760
  %314 = vmatpush.msra.mxu0 %v313
  %v315 = vand.u32 %v30, 4294901760
  %316 = vmatpush.msra.mxu0 %v315
  %v317 = vand.u32 %v29, 4294901760
  %318 = vmatpush.msra.mxu0 %v317
  %v319 = vand.u32 %v28, 4294901760
  %320 = vmatpush.msra.mxu0 %v319
  %v321 = vand.u32 %v27, 4294901760
  %322 = vmatpush.msra.mxu0 %v321
  %v323 = vand.u32 %v26, 4294901760
  %324 = vmatpush.msra.mxu0 %v323
  %v325 = vand.u32 %v25, 4294901760
  %326 = vmatpush.msra.mxu0 %v325
  %v327 = vand.u32 %v24, 4294901760
  %328 = vmatpush.msra.mxu0 %v327
  %v329 = vand.u32 %v23, 4294901760
  %330 = vmatpush.msra.mxu0 %v329
  %v331 = vand.u32 %v22, 4294901760
  %332 = vmatpush.msra.mxu0 %v331
  %v333 = vand.u32 %v21, 4294901760
  %334 = vmatpush.msra.mxu0 %v333
  %v335 = vand.u32 %v20, 4294901760
  %336 = vmatpush.msra.mxu0 %v335
  %v337 = vand.u32 %v301, 4294901760
  %v338 = vsub.f32 %v301, %v337
  %v339 = vand.u32 %v338, 4294901760
  %v340 = vsub.f32 %v338, %v339
  %v341 = vand.u32 %v340, 4294901760
  %342 = vmatmul.f32.gmra.mxu0 %v341
  %v343 = vpop.f32.mrf.mxu0
  %v344 = vadd.f32 0.0, %v343
  %v345 = vand.u32 %v302, 4294901760
  %v346 = vsub.f32 %v302, %v345
  %v347 = vand.u32 %v346, 4294901760
  %v348 = vsub.f32 %v346, %v347
  %v349 = vand.u32 %v348, 4294901760
  %350 = vmatmul.f32.gmra.mxu0 %v349
  %v351 = vpop.f32.mrf.mxu0
  %v352 = vadd.f32 0.0, %v351
  %v353 = vand.u32 %v303, 4294901760
  %v354 = vsub.f32 %v303, %v353
  %v355 = vand.u32 %v354, 4294901760
  %v356 = vsub.f32 %v354, %v355
  %v357 = vand.u32 %v356, 4294901760
  %358 = vmatmul.f32.gmra.mxu0 %v357
  %v359 = vpop.f32.mrf.mxu0
  %v360 = vadd.f32 0.0, %v359
  %v361 = vand.u32 %v304, 4294901760
  %v362 = vsub.f32 %v304, %v361
  %v363 = vand.u32 %v362, 4294901760
  %v364 = vsub.f32 %v362, %v363
  %v365 = vand.u32 %v364, 4294901760
  %366 = vmatmul.f32.gmra.mxu0 %v365
  %v367 = vpop.f32.mrf.mxu0
  %v368 = vadd.f32 0.0, %v367
  %369 = vdwg.mxu0
  %v370 = vand.u32 %v35, 4294901760
  %v371 = vsub.f32 %v35, %v370
  %v372 = vand.u32 %v371, 4294901760
  %v373 = vsub.f32 %v371, %v372
  %v374 = vand.u32 %v373, 4294901760
  %375 = vmatpush.msra.mxu0 %v374
  %v376 = vand.u32 %v34, 4294901760
  %v377 = vsub.f32 %v34, %v376
  %v378 = vand.u32 %v377, 4294901760
  %v379 = vsub.f32 %v377, %v378
  %v380 = vand.u32 %v379, 4294901760
  %381 = vmatpush.msra.mxu0 %v380
  %v382 = vand.u32 %v33, 4294901760
  %v383 = vsub.f32 %v33, %v382
  %v384 = vand.u32 %v383, 4294901760
  %v385 = vsub.f32 %v383, %v384
  %v386 = vand.u32 %v385, 4294901760
  %387 = vmatpush.msra.mxu0 %v386
  %v388 = vand.u32 %v32, 4294901760
  %v389 = vsub.f32 %v32, %v388
  %v390 = vand.u32 %v389, 4294901760
  %v391 = vsub.f32 %v389, %v390
  %v392 = vand.u32 %v391, 4294901760
  %393 = vmatpush.msra.mxu0 %v392
  %v394 = vand.u32 %v31, 4294901760
  %v395 = vsub.f32 %v31, %v394
  %v396 = vand.u32 %v395, 4294901760
  %v397 = vsub.f32 %v395, %v396
  %v398 = vand.u32 %v397, 4294901760
  %399 = vmatpush.msra.mxu0 %v398
  %v400 = vand.u32 %v30, 4294901760
  %v401 = vsub.f32 %v30, %v400
  %v402 = vand.u32 %v401, 4294901760
  %v403 = vsub.f32 %v401, %v402
  %v404 = vand.u32 %v403, 4294901760
  %405 = vmatpush.msra.mxu0 %v404
  %v406 = vand.u32 %v29, 4294901760
  %v407 = vsub.f32 %v29, %v406
  %v408 = vand.u32 %v407, 4294901760
  %v409 = vsub.f32 %v407, %v408
  %v410 = vand.u32 %v409, 4294901760
  %411 = vmatpush.msra.mxu0 %v410
  %v412 = vand.u32 %v28, 4294901760
  %v413 = vsub.f32 %v28, %v412
  %v414 = vand.u32 %v413, 4294901760
  %v415 = vsub.f32 %v413, %v414
  %v416 = vand.u32 %v415, 4294901760
  %417 = vmatpush.msra.mxu0 %v416
  %v418 = vand.u32 %v27, 4294901760
  %v419 = vsub.f32 %v27, %v418
  %v420 = vand.u32 %v419, 4294901760
  %v421 = vsub.f32 %v419, %v420
  %v422 = vand.u32 %v421, 4294901760
  %423 = vmatpush.msra.mxu0 %v422
  %v424 = vand.u32 %v26, 4294901760
  %v425 = vsub.f32 %v26, %v424
  %v426 = vand.u32 %v425, 4294901760
  %v427 = vsub.f32 %v425, %v426
  %v428 = vand.u32 %v427, 4294901760
  %429 = vmatpush.msra.mxu0 %v428
  %v430 = vand.u32 %v25, 4294901760
  %v431 = vsub.f32 %v25, %v430
  %v432 = vand.u32 %v431, 4294901760
  %v433 = vsub.f32 %v431, %v432
  %v434 = vand.u32 %v433, 4294901760
  %435 = vmatpush.msra.mxu0 %v434
  %v436 = vand.u32 %v24, 4294901760
  %v437 = vsub.f32 %v24, %v436
  %v438 = vand.u32 %v437, 4294901760
  %v439 = vsub.f32 %v437, %v438
  %v440 = vand.u32 %v439, 4294901760
  %441 = vmatpush.msra.mxu0 %v440
  %v442 = vand.u32 %v23, 4294901760
  %v443 = vsub.f32 %v23, %v442
  %v444 = vand.u32 %v443, 4294901760
  %v445 = vsub.f32 %v443, %v444
  %v446 = vand.u32 %v445, 4294901760
  %447 = vmatpush.msra.mxu0 %v446
  %v448 = vand.u32 %v22, 4294901760
  %v449 = vsub.f32 %v22, %v448
  %v450 = vand.u32 %v449, 4294901760
  %v451 = vsub.f32 %v449, %v450
  %v452 = vand.u32 %v451, 4294901760
  %453 = vmatpush.msra.mxu0 %v452
  %v454 = vand.u32 %v21, 4294901760
  %v455 = vsub.f32 %v21, %v454
  %v456 = vand.u32 %v455, 4294901760
  %v457 = vsub.f32 %v455, %v456
  %v458 = vand.u32 %v457, 4294901760
  %459 = vmatpush.msra.mxu0 %v458
  %v460 = vand.u32 %v20, 4294901760
  %v461 = vsub.f32 %v20, %v460
  %v462 = vand.u32 %v461, 4294901760
  %v463 = vsub.f32 %v461, %v462
  %v464 = vand.u32 %v463, 4294901760
  %465 = vmatpush.msra.mxu0 %v464
  %v466 = vand.u32 %v301, 4294901760
  %467 = vmatmul.f32.gmra.mxu0 %v466
  %v468 = vpop.f32.mrf.mxu0
  %v469 = vadd.f32 %v344, %v468
  %v470 = vand.u32 %v302, 4294901760
  %471 = vmatmul.f32.gmra.mxu0 %v470
  %v472 = vpop.f32.mrf.mxu0
  %v473 = vadd.f32 %v352, %v472
  %v474 = vand.u32 %v303, 4294901760
  %475 = vmatmul.f32.gmra.mxu0 %v474
  %v476 = vpop.f32.mrf.mxu0
  %v477 = vadd.f32 %v360, %v476
  %v478 = vand.u32 %v304, 4294901760
  %479 = vmatmul.f32.gmra.mxu0 %v478
  %v480 = vpop.f32.mrf.mxu0
  %v481 = vadd.f32 %v368, %v480
  %482 = vdwg.mxu0
  %v483 = vand.u32 %v35, 4294901760
  %v484 = vsub.f32 %v35, %v483
  %485 = vmatpush.msra.mxu0 %v484
  %v486 = vand.u32 %v34, 4294901760
  %v487 = vsub.f32 %v34, %v486
  %488 = vmatpush.msra.mxu0 %v487
  %v489 = vand.u32 %v33, 4294901760
  %v490 = vsub.f32 %v33, %v489
  %491 = vmatpush.msra.mxu0 %v490
  %v492 = vand.u32 %v32, 4294901760
  %v493 = vsub.f32 %v32, %v492
  %494 = vmatpush.msra.mxu0 %v493
  %v495 = vand.u32 %v31, 4294901760
  %v496 = vsub.f32 %v31, %v495
  %497 = vmatpush.msra.mxu0 %v496
  %v498 = vand.u32 %v30, 4294901760
  %v499 = vsub.f32 %v30, %v498
  %500 = vmatpush.msra.mxu0 %v499
  %v501 = vand.u32 %v29, 4294901760
  %v502 = vsub.f32 %v29, %v501
  %503 = vmatpush.msra.mxu0 %v502
  %v504 = vand.u32 %v28, 4294901760
  %v505 = vsub.f32 %v28, %v504
  %506 = vmatpush.msra.mxu0 %v505
  %v507 = vand.u32 %v27, 4294901760
  %v508 = vsub.f32 %v27, %v507
  %509 = vmatpush.msra.mxu0 %v508
  %v510 = vand.u32 %v26, 4294901760
  %v511 = vsub.f32 %v26, %v510
  %512 = vmatpush.msra.mxu0 %v511
  %v513 = vand.u32 %v25, 4294901760
  %v514 = vsub.f32 %v25, %v513
  %515 = vmatpush.msra.mxu0 %v514
  %v516 = vand.u32 %v24, 4294901760
  %v517 = vsub.f32 %v24, %v516
  %518 = vmatpush.msra.mxu0 %v517
  %v519 = vand.u32 %v23, 4294901760
  %v520 = vsub.f32 %v23, %v519
  %521 = vmatpush.msra.mxu0 %v520
  %v522 = vand.u32 %v22, 4294901760
  %v523 = vsub.f32 %v22, %v522
  %524 = vmatpush.msra.mxu0 %v523
  %v525 = vand.u32 %v21, 4294901760
  %v526 = vsub.f32 %v21, %v525
  %527 = vmatpush.msra.mxu0 %v526
  %v528 = vand.u32 %v20, 4294901760
  %v529 = vsub.f32 %v20, %v528
  %530 = vmatpush.msra.mxu0 %v529
  %v531 = vand.u32 %v301, 4294901760
  %v532 = vsub.f32 %v301, %v531
  %533 = vmatmul.f32.gmra.mxu0 %v532
  %v534 = vpop.f32.mrf.mxu0
  %v535 = vadd.f32 %v469, %v534
  %v536 = vand.u32 %v302, 4294901760
  %v537 = vsub.f32 %v302, %v536
  %538 = vmatmul.f32.gmra.mxu0 %v537
  %v539 = vpop.f32.mrf.mxu0
  %v540 = vadd.f32 %v473, %v539
  %v541 = vand.u32 %v303, 4294901760
  %v542 = vsub.f32 %v303, %v541
  %543 = vmatmul.f32.gmra.mxu0 %v542
  %v544 = vpop.f32.mrf.mxu0
  %v545 = vadd.f32 %v477, %v544
  %v546 = vand.u32 %v304, 4294901760
  %v547 = vsub.f32 %v304, %v546
  %548 = vmatmul.f32.gmra.mxu0 %v547
  %v549 = vpop.f32.mrf.mxu0
  %v550 = vadd.f32 %v481, %v549
  %551 = vdwg.mxu0
  %v552 = vand.u32 %v35, 4294901760
  %553 = vmatpush.msra.mxu0 %v552
  %v554 = vand.u32 %v34, 4294901760
  %555 = vmatpush.msra.mxu0 %v554
  %v556 = vand.u32 %v33, 4294901760
  %557 = vmatpush.msra.mxu0 %v556
  %v558 = vand.u32 %v32, 4294901760
  %559 = vmatpush.msra.mxu0 %v558
  %v560 = vand.u32 %v31, 4294901760
  %561 = vmatpush.msra.mxu0 %v560
  %v562 = vand.u32 %v30, 4294901760
  %563 = vmatpush.msra.mxu0 %v562
  %v564 = vand.u32 %v29, 4294901760
  %565 = vmatpush.msra.mxu0 %v564
  %v566 = vand.u32 %v28, 4294901760
  %567 = vmatpush.msra.mxu0 %v566
  %v568 = vand.u32 %v27, 4294901760
  %569 = vmatpush.msra.mxu0 %v568
  %v570 = vand.u32 %v26, 4294901760
  %571 = vmatpush.msra.mxu0 %v570
  %v572 = vand.u32 %v25, 4294901760
  %573 = vmatpush.msra.mxu0 %v572
  %v574 = vand.u32 %v24, 4294901760
  %575 = vmatpush.msra.mxu0 %v574
  %v576 = vand.u32 %v23, 4294901760
  %577 = vmatpush.msra.mxu0 %v576
  %v578 = vand.u32 %v22, 4294901760
  %579 = vmatpush.msra.mxu0 %v578
  %v580 = vand.u32 %v21, 4294901760
  %581 = vmatpush.msra.mxu0 %v580
  %v582 = vand.u32 %v20, 4294901760
  %583 = vmatpush.msra.mxu0 %v582
  %v584 = vand.u32 %v301, 4294901760
  %v585 = vsub.f32 %v301, %v584
  %v586 = vand.u32 %v585, 4294901760
  %587 = vmatmul.f32.gmra.mxu0 %v586
  %v588 = vpop.f32.mrf.mxu0
  %v589 = vadd.f32 %v535, %v588
  %v590 = vand.u32 %v302, 4294901760
  %v591 = vsub.f32 %v302, %v590
  %v592 = vand.u32 %v591, 4294901760
  %593 = vmatmul.f32.gmra.mxu0 %v592
  %v594 = vpop.f32.mrf.mxu0
  %v595 = vadd.f32 %v540, %v594
  %v596 = vand.u32 %v303, 4294901760
  %v597 = vsub.f32 %v303, %v596
  %v598 = vand.u32 %v597, 4294901760
  %599 = vmatmul.f32.gmra.mxu0 %v598
  %v600 = vpop.f32.mrf.mxu0
  %v601 = vadd.f32 %v545, %v600
  %v602 = vand.u32 %v304, 4294901760
  %v603 = vsub.f32 %v304, %v602
  %v604 = vand.u32 %v603, 4294901760
  %605 = vmatmul.f32.gmra.mxu0 %v604
  %v606 = vpop.f32.mrf.mxu0
  %v607 = vadd.f32 %v550, %v606
  %608 = vdwg.mxu0
  %v609 = vand.u32 %v35, 4294901760
  %v610 = vsub.f32 %v35, %v609
  %v611 = vand.u32 %v610, 4294901760
  %612 = vmatpush.msra.mxu0 %v611
  %v613 = vand.u32 %v34, 4294901760
  %v614 = vsub.f32 %v34, %v613
  %v615 = vand.u32 %v614, 4294901760
  %616 = vmatpush.msra.mxu0 %v615
  %v617 = vand.u32 %v33, 4294901760
  %v618 = vsub.f32 %v33, %v617
  %v619 = vand.u32 %v618, 4294901760
  %620 = vmatpush.msra.mxu0 %v619
  %v621 = vand.u32 %v32, 4294901760
  %v622 = vsub.f32 %v32, %v621
  %v623 = vand.u32 %v622, 4294901760
  %624 = vmatpush.msra.mxu0 %v623
  %v625 = vand.u32 %v31, 4294901760
  %v626 = vsub.f32 %v31, %v625
  %v627 = vand.u32 %v626, 4294901760
  %628 = vmatpush.msra.mxu0 %v627
  %v629 = vand.u32 %v30, 4294901760
  %v630 = vsub.f32 %v30, %v629
  %v631 = vand.u32 %v630, 4294901760
  %632 = vmatpush.msra.mxu0 %v631
  %v633 = vand.u32 %v29, 4294901760
  %v634 = vsub.f32 %v29, %v633
  %v635 = vand.u32 %v634, 4294901760
  %636 = vmatpush.msra.mxu0 %v635
  %v637 = vand.u32 %v28, 4294901760
  %v638 = vsub.f32 %v28, %v637
  %v639 = vand.u32 %v638, 4294901760
  %640 = vmatpush.msra.mxu0 %v639
  %v641 = vand.u32 %v27, 4294901760
  %v642 = vsub.f32 %v27, %v641
  %v643 = vand.u32 %v642, 4294901760
  %644 = vmatpush.msra.mxu0 %v643
  %v645 = vand.u32 %v26, 4294901760
  %v646 = vsub.f32 %v26, %v645
  %v647 = vand.u32 %v646, 4294901760
  %648 = vmatpush.msra.mxu0 %v647
  %v649 = vand.u32 %v25, 4294901760
  %v650 = vsub.f32 %v25, %v649
  %v651 = vand.u32 %v650, 4294901760
  %652 = vmatpush.msra.mxu0 %v651
  %v653 = vand.u32 %v24, 4294901760
  %v654 = vsub.f32 %v24, %v653
  %v655 = vand.u32 %v654, 4294901760
  %656 = vmatpush.msra.mxu0 %v655
  %v657 = vand.u32 %v23, 4294901760
  %v658 = vsub.f32 %v23, %v657
  %v659 = vand.u32 %v658, 4294901760
  %660 = vmatpush.msra.mxu0 %v659
  %v661 = vand.u32 %v22, 4294901760
  %v662 = vsub.f32 %v22, %v661
  %v663 = vand.u32 %v662, 4294901760
  %664 = vmatpush.msra.mxu0 %v663
  %v665 = vand.u32 %v21, 4294901760
  %v666 = vsub.f32 %v21, %v665
  %v667 = vand.u32 %v666, 4294901760
  %668 = vmatpush.msra.mxu0 %v667
  %v669 = vand.u32 %v20, 4294901760
  %v670 = vsub.f32 %v20, %v669
  %v671 = vand.u32 %v670, 4294901760
  %672 = vmatpush.msra.mxu0 %v671
  %v673 = vand.u32 %v301, 4294901760
  %674 = vmatmul.f32.gmra.mxu0 %v673
  %v675 = vpop.f32.mrf.mxu0
  %v676 = vadd.f32 %v589, %v675
  %v677 = vand.u32 %v302, 4294901760
  %678 = vmatmul.f32.gmra.mxu0 %v677
  %v679 = vpop.f32.mrf.mxu0
  %v680 = vadd.f32 %v595, %v679
  %v681 = vand.u32 %v303, 4294901760
  %682 = vmatmul.f32.gmra.mxu0 %v681
  %v683 = vpop.f32.mrf.mxu0
  %v684 = vadd.f32 %v601, %v683
  %v685 = vand.u32 %v304, 4294901760
  %686 = vmatmul.f32.gmra.mxu0 %v685
  %v687 = vpop.f32.mrf.mxu0
  %v688 = vadd.f32 %v607, %v687
  %689 = vdwg.mxu0
  %v690 = vand.u32 %v35, 4294901760
  %691 = vmatpush.msra.mxu0 %v690
  %v692 = vand.u32 %v34, 4294901760
  %693 = vmatpush.msra.mxu0 %v692
  %v694 = vand.u32 %v33, 4294901760
  %695 = vmatpush.msra.mxu0 %v694
  %v696 = vand.u32 %v32, 4294901760
  %697 = vmatpush.msra.mxu0 %v696
  %v698 = vand.u32 %v31, 4294901760
  %699 = vmatpush.msra.mxu0 %v698
  %v700 = vand.u32 %v30, 4294901760
  %701 = vmatpush.msra.mxu0 %v700
  %v702 = vand.u32 %v29, 4294901760
  %703 = vmatpush.msra.mxu0 %v702
  %v704 = vand.u32 %v28, 4294901760
  %705 = vmatpush.msra.mxu0 %v704
  %v706 = vand.u32 %v27, 4294901760
  %707 = vmatpush.msra.mxu0 %v706
  %v708 = vand.u32 %v26, 4294901760
  %709 = vmatpush.msra.mxu0 %v708
  %v710 = vand.u32 %v25, 4294901760
  %711 = vmatpush.msra.mxu0 %v710
  %v712 = vand.u32 %v24, 4294901760
  %713 = vmatpush.msra.mxu0 %v712
  %v714 = vand.u32 %v23, 4294901760
  %715 = vmatpush.msra.mxu0 %v714
  %v716 = vand.u32 %v22, 4294901760
  %717 = vmatpush.msra.mxu0 %v716
  %v718 = vand.u32 %v21, 4294901760
  %719 = vmatpush.msra.mxu0 %v718
  %v720 = vand.u32 %v20, 4294901760
  %721 = vmatpush.msra.mxu0 %v720
  %v722 = vand.u32 %v301, 4294901760
  %723 = vmatmul.f32.gmra.mxu0 %v722
  %v724 = vpop.f32.mrf.mxu0
  %v725 = vadd.f32 %v676, %v724
  %v726 = vand.u32 %v302, 4294901760
  %727 = vmatmul.f32.gmra.mxu0 %v726
  %v728 = vpop.f32.mrf.mxu0
  %v729 = vadd.f32 %v680, %v728
  %v730 = vand.u32 %v303, 4294901760
  %731 = vmatmul.f32.gmra.mxu0 %v730
  %v732 = vpop.f32.mrf.mxu0
  %v733 = vadd.f32 %v684, %v732
  %v734 = vand.u32 %v304, 4294901760
  %735 = vmatmul.f32.gmra.mxu0 %v734
  %v736 = vpop.f32.mrf.mxu0
  %v737 = vadd.f32 %v688, %v736
  %738 = vdwg.mxu0
  %v739 = vsel %vm36, %v725, -inf
  %740 = vmax.xlane.f32.xlu0 %v739
  %v741 = vpop.xlane.xlu0 %740
  %v742 = vsel %vm36, %v729, -inf
  %743 = vmax.xlane.f32.xlu0 %v742
  %v744 = vpop.xlane.xlu0 %743
  %v745 = vsel %vm36, %v733, -inf
  %746 = vmax.xlane.f32.xlu0 %v745
  %v747 = vpop.xlane.xlu0 %746
  %v748 = vsel %vm36, %v737, -inf
  %749 = vmax.xlane.f32.xlu0 %v748
  %v750 = vpop.xlane.xlu0 %749
  %v751 = vsub.f32 %v725, %v741
  %v752 = vsub.f32 %v729, %v744
  %v753 = vsub.f32 %v733, %v747
  %v754 = vsub.f32 %v737, %v750
  %v755 = vmul.f32 %v751, 1.442695
  %v756 = vpow.pop %v755
  %v757 = vmul.f32 %v752, 1.442695
  %v758 = vpow.pop %v757
  %v759 = vmul.f32 %v753, 1.442695
  %v760 = vpow.pop %v759
  %v761 = vmul.f32 %v754, 1.442695
  %v762 = vpow.pop %v761
  %v763 = vsel %vm36, %v756, 0.0
  %764 = vadd.xlane.f32.xlu0 %v763
  %v765 = vpop.xlane.xlu0 %764
  %v766 = vsel %vm36, %v758, 0.0
  %767 = vadd.xlane.f32.xlu0 %v766
  %v768 = vpop.xlane.xlu0 %767
  %v769 = vsel %vm36, %v760, 0.0
  %770 = vadd.xlane.f32.xlu0 %v769
  %v771 = vpop.xlane.xlu0 %770
  %v772 = vsel %vm36, %v762, 0.0
  %773 = vadd.xlane.f32.xlu0 %v772
  %v774 = vpop.xlane.xlu0 %773
  %v775 = vlog2.pop %v765
  %v776 = vmul.f32 %v775, 0.6931472
  %v777 = vlog2.pop %v768
  %v778 = vmul.f32 %v777, 0.6931472
  %v779 = vlog2.pop %v771
  %v780 = vmul.f32 %v779, 0.6931472
  %v781 = vlog2.pop %v774
  %v782 = vmul.f32 %v781, 0.6931472
  %v783 = vadd.f32 %v741, %v776
  %v784 = vadd.f32 %v744, %v778
  %v785 = vadd.f32 %v747, %v780
  %v786 = vadd.f32 %v750, %v782
  %v787 = vsub.f32 %v725, %v783
  %v788 = vsub.f32 %v729, %v784
  %v789 = vsub.f32 %v733, %v785
  %v790 = vsub.f32 %v737, %v786
  %791 = vst.msk [vmem:[%s3] sm:$0xff] %vm36, %v787
  %792 = vst.msk [vmem:[%s3 + $0x8] sm:$0xff] %vm36, %v788
  %793 = vst.msk [vmem:[%s3 + $0x10] sm:$0xff] %vm36, %v789
  %794 = vst.msk [vmem:[%s3 + $0x18] sm:$0xff] %vm36, %v790
  // Predicated region
  $region14: #{tpu_custom_call.1} parent=0 // pred_check
    _
  $region15: #{tpu_custom_call.1} parent=0 // pred_check_branch
    %796 = sbr.rel (0) target = $region17
  $region16: #{tpu_custom_call.1} parent=0 // pred_region
    _
  $region17: #{tpu_custom_call.1} parent=0 // pred_fallthru
    _
  // Predicated region
  $region18: #{tpu_custom_call.1} parent=0 // pred_check
    _
  $region19: #{tpu_custom_call.1} parent=0 // pred_check_branch
    %798 = sbr.rel (0) target = $region21
  $region20: #{tpu_custom_call.1} parent=0 // pred_region
    _
  $region21: #{tpu_custom_call.1} parent=0 // pred_fallthru
    _

// kernel: tpu_custom_call.1
$region0: #{tpu_custom_call.1}
  #allocation0 [shape = 'u32[]', space=smem, size = 0x4, offset = 0x4, fixed_abs, tag = 'smem constant byte address 0x4 - core index']
  #allocation1 [shape = 'u32[72,128]{1,0:T(1,128)}', space=vmem, size = 0x9000, scoped, tag = 'internal scratch']
  %s0 = inlined_call_operand.vmem [shape: f32[32,16], index: 0, kind: input, shape index: {}]
  %s1 = inlined_call_operand.vmem [shape: f32[16,128], index: 1, kind: input, shape index: {}]
  %s2 = inlined_call_operand.vmem [shape: f32[128,16], index: 2, kind: input, shape index: {}]
  %s3 = inlined_call_operand.vmem [shape: f32[32,16], index: 3, kind: output, shape index: {}]
  %s4 = sld [smem:[#allocation0]]
  $region22: #{tpu_custom_call.1} parent=0
    _
  %s6 = ssub.s32 1, %s4
  %s7 = scalar_select 0, %s6, %s4
  // Predicated region
  $region2: #{tpu_custom_call.1} parent=0 // pred_check
    _
  $region3: #{tpu_custom_call.1} parent=0 // pred_check_branch
    %9 = sbr.rel (0) target = $region5
  $region4: #{tpu_custom_call.1} parent=0 // pred_region
    _
  $region5: #{tpu_custom_call.1} parent=0 // pred_fallthru
    _
  // Predicated region
  $region6: #{tpu_custom_call.1} parent=0 // pred_check
    _
  $region7: #{tpu_custom_call.1} parent=0 // pred_check_branch
    %11 = sbr.rel (0) target = $region9
  $region8: #{tpu_custom_call.1} parent=0 // pred_region
    _
  $region9: #{tpu_custom_call.1} parent=0 // pred_fallthru
    _
  // Predicated region
  $region10: #{tpu_custom_call.1} parent=0 // pred_check
    _
  $region11: #{tpu_custom_call.1} parent=0 // pred_check_branch
    %13 = sbr.rel (0) target = $region13
  $region12: #{tpu_custom_call.1} parent=0 // pred_region
    _
  $region13: #{tpu_custom_call.1} parent=0 // pred_fallthru
    _
  %v14 = vld [vmem:[%s0] sm:$0xff]
  %v15 = vld [vmem:[%s0 + $0x8] sm:$0xff]
  %v16 = vld [vmem:[%s0 + $0x10] sm:$0xff]
  %v17 = vld [vmem:[%s0 + $0x18] sm:$0xff]
  %v18 = vld [vmem:[%s1] sm:$0xff]
  %v19 = vld [vmem:[%s1 + $0x8] sm:$0xff]
  %v20 = vld [vmem:[%s2] sm:$0xff]
  %v21 = vld [vmem:[%s2 + $0x8] sm:$0xff]
  %v22 = vld [vmem:[%s2 + $0x10] sm:$0xff]
  %v23 = vld [vmem:[%s2 + $0x18] sm:$0xff]
  %v24 = vld [vmem:[%s2 + $0x20] sm:$0xff]
  %v25 = vld [vmem:[%s2 + $0x28] sm:$0xff]
  %v26 = vld [vmem:[%s2 + $0x30] sm:$0xff]
  %v27 = vld [vmem:[%s2 + $0x38] sm:$0xff]
  %v28 = vld [vmem:[%s2 + $0x40] sm:$0xff]
  %v29 = vld [vmem:[%s2 + $0x48] sm:$0xff]
  %v30 = vld [vmem:[%s2 + $0x50] sm:$0xff]
  %v31 = vld [vmem:[%s2 + $0x58] sm:$0xff]
  %v32 = vld [vmem:[%s2 + $0x60] sm:$0xff]
  %v33 = vld [vmem:[%s2 + $0x68] sm:$0xff]
  %v34 = vld [vmem:[%s2 + $0x70] sm:$0xff]
  %v35 = vld [vmem:[%s2 + $0x78] sm:$0xff]
  %vm36 = vcmask 130048
  %v38 = vsel %vm36, %v14, 0
  %v41 = vsel %vm36, %v15, 0
  %v44 = vsel %vm36, %v16, 0
  %v47 = vsel %vm36, %v17, 0
  %49 = vmatpush.msra.mxu0 0.0
  %50 = vmatpush.msra.mxu0 0.0
  %51 = vmatpush.msra.mxu0 0.0
  %52 = vmatpush.msra.mxu0 0.0
  %53 = vmatpush.msra.mxu0 0.0
  %54 = vmatpush.msra.mxu0 0.0
  %55 = vmatpush.msra.mxu0 0.0
  %56 = vmatpush.msra.mxu0 0.0
  %57 = vmatpush.msra.mxu0 0.0
  %58 = vmatpush.msra.mxu0 0.0
  %59 = vmatpush.msra.mxu0 0.0
  %60 = vmatpush.msra.mxu0 0.0
  %61 = vmatpush.msra.mxu0 0.0
  %62 = vmatpush.msra.mxu0 0.0
  %v63 = vand.u32 %v19, 4294901760
  %64 = vmatpush.msra.mxu0 %v63
  %v65 = vand.u32 %v18, 4294901760
  %66 = vmatpush.msra.mxu0 %v65
  %v67 = vand.u32 %v38, 4294901760
  %v68 = vsub.f32 %v38, %v67
  %v69 = vand.u32 %v68, 4294901760
  %v70 = vsub.f32 %v68, %v69
  %v71 = vand.u32 %v70, 4294901760
  %72 = vmatmul.f32.gmra.mxu0 %v71
  %v73 = vpop.f32.mrf.mxu0
  %v74 = vadd.f32 0.0, %v73
  %v75 = vand.u32 %v41, 4294901760
  %v76 = vsub.f32 %v41, %v75
  %v77 = vand.u32 %v76, 4294901760
  %v78 = vsub.f32 %v76, %v77
  %v79 = vand.u32 %v78, 4294901760
  %80 = vmatmul.f32.gmra.mxu0 %v79
  %v81 = vpop.f32.mrf.mxu0
  %v82 = vadd.f32 0.0, %v81
  %v83 = vand.u32 %v44, 4294901760
  %v84 = vsub.f32 %v44, %v83
  %v85 = vand.u32 %v84, 4294901760
  %v86 = vsub.f32 %v84, %v85
  %v87 = vand.u32 %v86, 4294901760
  %88 = vmatmul.f32.gmra.mxu0 %v87
  %v89 = vpop.f32.mrf.mxu0
  %v90 = vadd.f32 0.0, %v89
  %v91 = vand.u32 %v47, 4294901760
  %v92 = vsub.f32 %v47, %v91
  %v93 = vand.u32 %v92, 4294901760
  %v94 = vsub.f32 %v92, %v93
  %v95 = vand.u32 %v94, 4294901760
  %96 = vmatmul.f32.gmra.mxu0 %v95
  %v97 = vpop.f32.mrf.mxu0
  %v98 = vadd.f32 0.0, %v97
  %99 = vdwg.mxu0
  %100 = vmatpush.msra.mxu0 0.0
  %101 = vmatpush.msra.mxu0 0.0
  %102 = vmatpush.msra.mxu0 0.0
  %103 = vmatpush.msra.mxu0 0.0
  %104 = vmatpush.msra.mxu0 0.0
  %105 = vmatpush.msra.mxu0 0.0
  %106 = vmatpush.msra.mxu0 0.0
  %107 = vmatpush.msra.mxu0 0.0
  %108 = vmatpush.msra.mxu0 0.0
  %109 = vmatpush.msra.mxu0 0.0
  %110 = vmatpush.msra.mxu0 0.0
  %111 = vmatpush.msra.mxu0 0.0
  %112 = vmatpush.msra.mxu0 0.0
  %113 = vmatpush.msra.mxu0 0.0
  %v114 = vand.u32 %v19, 4294901760
  %v115 = vsub.f32 %v19, %v114
  %v116 = vand.u32 %v115, 4294901760
  %v117 = vsub.f32 %v115, %v116
  %v118 = vand.u32 %v117, 4294901760
  %119 = vmatpush.msra.mxu0 %v118
  %v120 = vand.u32 %v18, 4294901760
  %v121 = vsub.f32 %v18, %v120
  %v122 = vand.u32 %v121, 4294901760
  %v123 = vsub.f32 %v121, %v122
  %v124 = vand.u32 %v123, 4294901760
  %125 = vmatpush.msra.mxu0 %v124
  %v126 = vand.u32 %v38, 4294901760
  %127 = vmatmul.f32.gmra.mxu0 %v126
  %v128 = vpop.f32.mrf.mxu0
  %v129 = vadd.f32 %v74, %v128
  %v130 = vand.u32 %v41, 4294901760
  %131 = vmatmul.f32.gmra.mxu0 %v130
  %v132 = vpop.f32.mrf.mxu0
  %v133 = vadd.f32 %v82, %v132
  %v134 = vand.u32 %v44, 4294901760
  %135 = vmatmul.f32.gmra.mxu0 %v134
  %v136 = vpop.f32.mrf.mxu0
  %v137 = vadd.f32 %v90, %v136
  %v138 = vand.u32 %v47, 4294901760
  %139 = vmatmul.f32.gmra.mxu0 %v138
  %v140 = vpop.f32.mrf.mxu0
  %v141 = vadd.f32 %v98, %v140
  %142 = vdwg.mxu0
  %143 = vmatpush.msra.mxu0 0.0
  %144 = vmatpush.msra.mxu0 0.0
  %145 = vmatpush.msra.mxu0 0.0
  %146 = vmatpush.msra.mxu0 0.0
  %147 = vmatpush.msra.mxu0 0.0
  %148 = vmatpush.msra.mxu0 0.0
  %149 = vmatpush.msra.mxu0 0.0
  %150 = vmatpush.msra.mxu0 0.0
  %151 = vmatpush.msra.mxu0 0.0
  %152 = vmatpush.msra.mxu0 0.0
  %153 = vmatpush.msra.mxu0 0.0
  %154 = vmatpush.msra.mxu0 0.0
  %155 = vmatpush.msra.mxu0 0.0
  %156 = vmatpush.msra.mxu0 0.0
  %v157 = vand.u32 %v19, 4294901760
  %v158 = vsub.f32 %v19, %v157
  %159 = vmatpush.msra.mxu0 %v158
  %v160 = vand.u32 %v18, 4294901760
  %v161 = vsub.f32 %v18, %v160
  %162 = vmatpush.msra.mxu0 %v161
  %v163 = vand.u32 %v38, 4294901760
  %v164 = vsub.f32 %v38, %v163
  %165 = vmatmul.f32.gmra.mxu0 %v164
  %v166 = vpop.f32.mrf.mxu0
  %v167 = vadd.f32 %v129, %v166
  %v168 = vand.u32 %v41, 4294901760
  %v169 = vsub.f32 %v41, %v168
  %170 = vmatmul.f32.gmra.mxu0 %v169
  %v171 = vpop.f32.mrf.mxu0
  %v172 = vadd.f32 %v133, %v171
  %v173 = vand.u32 %v44, 4294901760
  %v174 = vsub.f32 %v44, %v173
  %175 = vmatmul.f32.gmra.mxu0 %v174
  %v176 = vpop.f32.mrf.mxu0
  %v177 = vadd.f32 %v137, %v176
  %v178 = vand.u32 %v47, 4294901760
  %v179 = vsub.f32 %v47, %v178
  %180 = vmatmul.f32.gmra.mxu0 %v179
  %v181 = vpop.f32.mrf.mxu0
  %v182 = vadd.f32 %v141, %v181
  %183 = vdwg.mxu0
  %184 = vmatpush.msra.mxu0 0.0
  %185 = vmatpush.msra.mxu0 0.0
  %186 = vmatpush.msra.mxu0 0.0
  %187 = vmatpush.msra.mxu0 0.0
  %188 = vmatpush.msra.mxu0 0.0
  %189 = vmatpush.msra.mxu0 0.0
  %190 = vmatpush.msra.mxu0 0.0
  %191 = vmatpush.msra.mxu0 0.0
  %192 = vmatpush.msra.mxu0 0.0
  %193 = vmatpush.msra.mxu0 0.0
  %194 = vmatpush.msra.mxu0 0.0
  %195 = vmatpush.msra.mxu0 0.0
  %196 = vmatpush.msra.mxu0 0.0
  %197 = vmatpush.msra.mxu0 0.0
  %v198 = vand.u32 %v19, 4294901760
  %199 = vmatpush.msra.mxu0 %v198
  %v200 = vand.u32 %v18, 4294901760
  %201 = vmatpush.msra.mxu0 %v200
  %v202 = vand.u32 %v38, 4294901760
  %v203 = vsub.f32 %v38, %v202
  %v204 = vand.u32 %v203, 4294901760
  %205 = vmatmul.f32.gmra.mxu0 %v204
  %v206 = vpop.f32.mrf.mxu0
  %v207 = vadd.f32 %v167, %v206
  %v208 = vand.u32 %v41, 4294901760
  %v209 = vsub.f32 %v41, %v208
  %v210 = vand.u32 %v209, 4294901760
  %211 = vmatmul.f32.gmra.mxu0 %v210
  %v212 = vpop.f32.mrf.mxu0
  %v213 = vadd.f32 %v172, %v212
  %v214 = vand.u32 %v44, 4294901760
  %v215 = vsub.f32 %v44, %v214
  %v216 = vand.u32 %v215, 4294901760
  %217 = vmatmul.f32.gmra.mxu0 %v216
  %v218 = vpop.f32.mrf.mxu0
  %v219 = vadd.f32 %v177, %v218
  %v220 = vand.u32 %v47, 4294901760
  %v221 = vsub.f32 %v47, %v220
  %v222 = vand.u32 %v221, 4294901760
  %223 = vmatmul.f32.gmra.mxu0 %v222
  %v224 = vpop.f32.mrf.mxu0
  %v225 = vadd.f32 %v182, %v224
  %226 = vdwg.mxu0
  %227 = vmatpush.msra.mxu0 0.0
  %228 = vmatpush.msra.mxu0 0.0
  %229 = vmatpush.msra.mxu0 0.0
  %230 = vmatpush.msra.mxu0 0.0
  %231 = vmatpush.msra.mxu0 0.0
  %232 = vmatpush.msra.mxu0 0.0
  %233 = vmatpush.msra.mxu0 0.0
  %234 = vmatpush.msra.mxu0 0.0
  %235 = vmatpush.msra.mxu0 0.0
  %236 = vmatpush.msra.mxu0 0.0
  %237 = vmatpush.msra.mxu0 0.0
  %238 = vmatpush.msra.mxu0 0.0
  %239 = vmatpush.msra.mxu0 0.0
  %240 = vmatpush.msra.mxu0 0.0
  %v241 = vand.u32 %v19, 4294901760
  %v242 = vsub.f32 %v19, %v241
  %v243 = vand.u32 %v242, 4294901760
  %244 = vmatpush.msra.mxu0 %v243
  %v245 = vand.u32 %v18, 4294901760
  %v246 = vsub.f32 %v18, %v245
  %v247 = vand.u32 %v246, 4294901760
  %248 = vmatpush.msra.mxu0 %v247
  %v249 = vand.u32 %v38, 4294901760
  %250 = vmatmul.f32.gmra.mxu0 %v249
  %v251 = vpop.f32.mrf.mxu0
  %v252 = vadd.f32 %v207, %v251
  %v253 = vand.u32 %v41, 4294901760
  %254 = vmatmul.f32.gmra.mxu0 %v253
  %v255 = vpop.f32.mrf.mxu0
  %v256 = vadd.f32 %v213, %v255
  %v257 = vand.u32 %v44, 4294901760
  %258 = vmatmul.f32.gmra.mxu0 %v257
  %v259 = vpop.f32.mrf.mxu0
  %v260 = vadd.f32 %v219, %v259
  %v261 = vand.u32 %v47, 4294901760
  %262 = vmatmul.f32.gmra.mxu0 %v261
  %v263 = vpop.f32.mrf.mxu0
  %v264 = vadd.f32 %v225, %v263
  %265 = vdwg.mxu0
  %266 = vmatpush.msra.mxu0 0.0
  %267 = vmatpush.msra.mxu0 0.0
  %268 = vmatpush.msra.mxu0 0.0
  %269 = vmatpush.msra.mxu0 0.0
  %270 = vmatpush.msra.mxu0 0.0
  %271 = vmatpush.msra.mxu0 0.0
  %272 = vmatpush.msra.mxu0 0.0
  %273 = vmatpush.msra.mxu0 0.0
  %274 = vmatpush.msra.mxu0 0.0
  %275 = vmatpush.msra.mxu0 0.0
  %276 = vmatpush.msra.mxu0 0.0
  %277 = vmatpush.msra.mxu0 0.0
  %278 = vmatpush.msra.mxu0 0.0
  %279 = vmatpush.msra.mxu0 0.0
  %v280 = vand.u32 %v19, 4294901760
  %281 = vmatpush.msra.mxu0 %v280
  %v282 = vand.u32 %v18, 4294901760
  %283 = vmatpush.msra.mxu0 %v282
  %v284 = vand.u32 %v38, 4294901760
  %285 = vmatmul.f32.gmra.mxu0 %v284
  %v286 = vpop.f32.mrf.mxu0
  %v287 = vadd.f32 %v252, %v286
  %v288 = vand.u32 %v41, 4294901760
  %289 = vmatmul.f32.gmra.mxu0 %v288
  %v290 = vpop.f32.mrf.mxu0
  %v291 = vadd.f32 %v256, %v290
  %v292 = vand.u32 %v44, 4294901760
  %293 = vmatmul.f32.gmra.mxu0 %v292
  %v294 = vpop.f32.mrf.mxu0
  %v295 = vadd.f32 %v260, %v294
  %v296 = vand.u32 %v47, 4294901760
  %297 = vmatmul.f32.gmra.mxu0 %v296
  %v298 = vpop.f32.mrf.mxu0
  %v299 = vadd.f32 %v264, %v298
  %300 = vdwg.mxu0
  %v301 = vtanh.pop %v287
  %v302 = vtanh.pop %v291
  %v303 = vtanh.pop %v295
  %v304 = vtanh.pop %v299
  %v305 = vand.u32 %v35, 4294901760
  %306 = vmatpush.msra.mxu0 %v305
  %v307 = vand.u32 %v34, 4294901760
  %308 = vmatpush.msra.mxu0 %v307
  %v309 = vand.u32 %v33, 4294901760
  %310 = vmatpush.msra.mxu0 %v309
  %v311 = vand.u32 %v32, 4294901760
  %312 = vmatpush.msra.mxu0 %v311
  %v313 = vand.u32 %v31, 4294901760
  %314 = vmatpush.msra.mxu0 %v313
  %v315 = vand.u32 %v30, 4294901760
  %316 = vmatpush.msra.mxu0 %v315
  %v317 = vand.u32 %v29, 4294901760
  %318 = vmatpush.msra.mxu0 %v317
  %v319 = vand.u32 %v28, 4294901760
  %320 = vmatpush.msra.mxu0 %v319
  %v321 = vand.u32 %v27, 4294901760
  %322 = vmatpush.msra.mxu0 %v321
  %v323 = vand.u32 %v26, 4294901760
  %324 = vmatpush.msra.mxu0 %v323
  %v325 = vand.u32 %v25, 4294901760
  %326 = vmatpush.msra.mxu0 %v325
  %v327 = vand.u32 %v24, 4294901760
  %328 = vmatpush.msra.mxu0 %v327
  %v329 = vand.u32 %v23, 4294901760
  %330 = vmatpush.msra.mxu0 %v329
  %v331 = vand.u32 %v22, 4294901760
  %332 = vmatpush.msra.mxu0 %v331
  %v333 = vand.u32 %v21, 4294901760
  %334 = vmatpush.msra.mxu0 %v333
  %v335 = vand.u32 %v20, 4294901760
  %336 = vmatpush.msra.mxu0 %v335
  %v337 = vand.u32 %v301, 4294901760
  %v338 = vsub.f32 %v301, %v337
  %v339 = vand.u32 %v338, 4294901760
  %v340 = vsub.f32 %v338, %v339
  %v341 = vand.u32 %v340, 4294901760
  %342 = vmatmul.f32.gmra.mxu0 %v341
  %v343 = vpop.f32.mrf.mxu0
  %v344 = vadd.f32 0.0, %v343
  %v345 = vand.u32 %v302, 4294901760
  %v346 = vsub.f32 %v302, %v345
  %v347 = vand.u32 %v346, 4294901760
  %v348 = vsub.f32 %v346, %v347
  %v349 = vand.u32 %v348, 4294901760
  %350 = vmatmul.f32.gmra.mxu0 %v349
  %v351 = vpop.f32.mrf.mxu0
  %v352 = vadd.f32 0.0, %v351
  %v353 = vand.u32 %v303, 4294901760
  %v354 = vsub.f32 %v303, %v353
  %v355 = vand.u32 %v354, 4294901760
  %v356 = vsub.f32 %v354, %v355
  %v357 = vand.u32 %v356, 4294901760
  %358 = vmatmul.f32.gmra.mxu0 %v357
  %v359 = vpop.f32.mrf.mxu0
  %v360 = vadd.f32 0.0, %v359
  %v361 = vand.u32 %v304, 4294901760
  %v362 = vsub.f32 %v304, %v361
  %v363 = vand.u32 %v362, 4294901760
  %v364 = vsub.f32 %v362, %v363
  %v365 = vand.u32 %v364, 4294901760
  %366 = vmatmul.f32.gmra.mxu0 %v365
  %v367 = vpop.f32.mrf.mxu0
  %v368 = vadd.f32 0.0, %v367
  %369 = vdwg.mxu0
  %v370 = vand.u32 %v35, 4294901760
  %v371 = vsub.f32 %v35, %v370
  %v372 = vand.u32 %v371, 4294901760
  %v373 = vsub.f32 %v371, %v372
  %v374 = vand.u32 %v373, 4294901760
  %375 = vmatpush.msra.mxu0 %v374
  %v376 = vand.u32 %v34, 4294901760
  %v377 = vsub.f32 %v34, %v376
  %v378 = vand.u32 %v377, 4294901760
  %v379 = vsub.f32 %v377, %v378
  %v380 = vand.u32 %v379, 4294901760
  %381 = vmatpush.msra.mxu0 %v380
  %v382 = vand.u32 %v33, 4294901760
  %v383 = vsub.f32 %v33, %v382
  %v384 = vand.u32 %v383, 4294901760
  %v385 = vsub.f32 %v383, %v384
  %v386 = vand.u32 %v385, 4294901760
  %387 = vmatpush.msra.mxu0 %v386
  %v388 = vand.u32 %v32, 4294901760
  %v389 = vsub.f32 %v32, %v388
  %v390 = vand.u32 %v389, 4294901760
  %v391 = vsub.f32 %v389, %v390
  %v392 = vand.u32 %v391, 4294901760
  %393 = vmatpush.msra.mxu0 %v392
  %v394 = vand.u32 %v31, 4294901760
  %v395 = vsub.f32 %v31, %v394
  %v396 = vand.u32 %v395, 4294901760
  %v397 = vsub.f32 %v395, %v396
  %v398 = vand.u32 %v397, 4294901760
  %399 = vmatpush.msra.mxu0 %v398
  %v400 = vand.u32 %v30, 4294901760
  %v401 = vsub.f32 %v30, %v400
  %v402 = vand.u32 %v401, 4294901760
  %v403 = vsub.f32 %v401, %v402
  %v404 = vand.u32 %v403, 4294901760
  %405 = vmatpush.msra.mxu0 %v404
  %v406 = vand.u32 %v29, 4294901760
  %v407 = vsub.f32 %v29, %v406
  %v408 = vand.u32 %v407, 4294901760
  %v409 = vsub.f32 %v407, %v408
  %v410 = vand.u32 %v409, 4294901760
  %411 = vmatpush.msra.mxu0 %v410
  %v412 = vand.u32 %v28, 4294901760
  %v413 = vsub.f32 %v28, %v412
  %v414 = vand.u32 %v413, 4294901760
  %v415 = vsub.f32 %v413, %v414
  %v416 = vand.u32 %v415, 4294901760
  %417 = vmatpush.msra.mxu0 %v416
  %v418 = vand.u32 %v27, 4294901760
  %v419 = vsub.f32 %v27, %v418
  %v420 = vand.u32 %v419, 4294901760
  %v421 = vsub.f32 %v419, %v420
  %v422 = vand.u32 %v421, 4294901760
  %423 = vmatpush.msra.mxu0 %v422
  %v424 = vand.u32 %v26, 4294901760
  %v425 = vsub.f32 %v26, %v424
  %v426 = vand.u32 %v425, 4294901760
  %v427 = vsub.f32 %v425, %v426
  %v428 = vand.u32 %v427, 4294901760
  %429 = vmatpush.msra.mxu0 %v428
  %v430 = vand.u32 %v25, 4294901760
  %v431 = vsub.f32 %v25, %v430
  %v432 = vand.u32 %v431, 4294901760
  %v433 = vsub.f32 %v431, %v432
  %v434 = vand.u32 %v433, 4294901760
  %435 = vmatpush.msra.mxu0 %v434
  %v436 = vand.u32 %v24, 4294901760
  %v437 = vsub.f32 %v24, %v436
  %v438 = vand.u32 %v437, 4294901760
  %v439 = vsub.f32 %v437, %v438
  %v440 = vand.u32 %v439, 4294901760
  %441 = vmatpush.msra.mxu0 %v440
  %v442 = vand.u32 %v23, 4294901760
  %v443 = vsub.f32 %v23, %v442
  %v444 = vand.u32 %v443, 4294901760
  %v445 = vsub.f32 %v443, %v444
  %v446 = vand.u32 %v445, 4294901760
  %447 = vmatpush.msra.mxu0 %v446
  %v448 = vand.u32 %v22, 4294901760
  %v449 = vsub.f32 %v22, %v448
  %v450 = vand.u32 %v449, 4294901760
  %v451 = vsub.f32 %v449, %v450
  %v452 = vand.u32 %v451, 4294901760
  %453 = vmatpush.msra.mxu0 %v452
  %v454 = vand.u32 %v21, 4294901760
  %v455 = vsub.f32 %v21, %v454
  %v456 = vand.u32 %v455, 4294901760
  %v457 = vsub.f32 %v455, %v456
  %v458 = vand.u32 %v457, 4294901760
  %459 = vmatpush.msra.mxu0 %v458
  %v460 = vand.u32 %v20, 4294901760
  %v461 = vsub.f32 %v20, %v460
  %v462 = vand.u32 %v461, 4294901760
  %v463 = vsub.f32 %v461, %v462
  %v464 = vand.u32 %v463, 4294901760
  %465 = vmatpush.msra.mxu0 %v464
  %v466 = vand.u32 %v301, 4294901760
  %467 = vmatmul.f32.gmra.mxu0 %v466
  %v468 = vpop.f32.mrf.mxu0
  %v469 = vadd.f32 %v344, %v468
  %v470 = vand.u32 %v302, 4294901760
  %471 = vmatmul.f32.gmra.mxu0 %v470
  %v472 = vpop.f32.mrf.mxu0
  %v473 = vadd.f32 %v352, %v472
  %v474 = vand.u32 %v303, 4294901760
  %475 = vmatmul.f32.gmra.mxu0 %v474
  %v476 = vpop.f32.mrf.mxu0
  %v477 = vadd.f32 %v360, %v476
  %v478 = vand.u32 %v304, 4294901760
  %479 = vmatmul.f32.gmra.mxu0 %v478
  %v480 = vpop.f32.mrf.mxu0
  %v481 = vadd.f32 %v368, %v480
  %482 = vdwg.mxu0
  %v483 = vand.u32 %v35, 4294901760
  %v484 = vsub.f32 %v35, %v483
  %485 = vmatpush.msra.mxu0 %v484
  %v486 = vand.u32 %v34, 4294901760
  %v487 = vsub.f32 %v34, %v486
  %488 = vmatpush.msra.mxu0 %v487
  %v489 = vand.u32 %v33, 4294901760
  %v490 = vsub.f32 %v33, %v489
  %491 = vmatpush.msra.mxu0 %v490
  %v492 = vand.u32 %v32, 4294901760
  %v493 = vsub.f32 %v32, %v492
  %494 = vmatpush.msra.mxu0 %v493
  %v495 = vand.u32 %v31, 4294901760
  %v496 = vsub.f32 %v31, %v495
  %497 = vmatpush.msra.mxu0 %v496
  %v498 = vand.u32 %v30, 4294901760
  %v499 = vsub.f32 %v30, %v498
  %500 = vmatpush.msra.mxu0 %v499
  %v501 = vand.u32 %v29, 4294901760
  %v502 = vsub.f32 %v29, %v501
  %503 = vmatpush.msra.mxu0 %v502
  %v504 = vand.u32 %v28, 4294901760
  %v505 = vsub.f32 %v28, %v504
  %506 = vmatpush.msra.mxu0 %v505
  %v507 = vand.u32 %v27, 4294901760
  %v508 = vsub.f32 %v27, %v507
  %509 = vmatpush.msra.mxu0 %v508
  %v510 = vand.u32 %v26, 4294901760
  %v511 = vsub.f32 %v26, %v510
  %512 = vmatpush.msra.mxu0 %v511
  %v513 = vand.u32 %v25, 4294901760
  %v514 = vsub.f32 %v25, %v513
  %515 = vmatpush.msra.mxu0 %v514
  %v516 = vand.u32 %v24, 4294901760
  %v517 = vsub.f32 %v24, %v516
  %518 = vmatpush.msra.mxu0 %v517
  %v519 = vand.u32 %v23, 4294901760
  %v520 = vsub.f32 %v23, %v519
  %521 = vmatpush.msra.mxu0 %v520
  %v522 = vand.u32 %v22, 4294901760
  %v523 = vsub.f32 %v22, %v522
  %524 = vmatpush.msra.mxu0 %v523
  %v525 = vand.u32 %v21, 4294901760
  %v526 = vsub.f32 %v21, %v525
  %527 = vmatpush.msra.mxu0 %v526
  %v528 = vand.u32 %v20, 4294901760
  %v529 = vsub.f32 %v20, %v528
  %530 = vmatpush.msra.mxu0 %v529
  %v531 = vand.u32 %v301, 4294901760
  %v532 = vsub.f32 %v301, %v531
  %533 = vmatmul.f32.gmra.mxu0 %v532
  %v534 = vpop.f32.mrf.mxu0
  %v535 = vadd.f32 %v469, %v534
  %v536 = vand.u32 %v302, 4294901760
  %v537 = vsub.f32 %v302, %v536
  %538 = vmatmul.f32.gmra.mxu0 %v537
  %v539 = vpop.f32.mrf.mxu0
  %v540 = vadd.f32 %v473, %v539
  %v541 = vand.u32 %v303, 4294901760
  %v542 = vsub.f32 %v303, %v541
  %543 = vmatmul.f32.gmra.mxu0 %v542
  %v544 = vpop.f32.mrf.mxu0
  %v545 = vadd.f32 %v477, %v544
  %v546 = vand.u32 %v304, 4294901760
  %v547 = vsub.f32 %v304, %v546
  %548 = vmatmul.f32.gmra.mxu0 %v547
  %v549 = vpop.f32.mrf.mxu0
  %v550 = vadd.f32 %v481, %v549
  %551 = vdwg.mxu0
  %v552 = vand.u32 %v35, 4294901760
  %553 = vmatpush.msra.mxu0 %v552
  %v554 = vand.u32 %v34, 4294901760
  %555 = vmatpush.msra.mxu0 %v554
  %v556 = vand.u32 %v33, 4294901760
  %557 = vmatpush.msra.mxu0 %v556
  %v558 = vand.u32 %v32, 4294901760
  %559 = vmatpush.msra.mxu0 %v558
  %v560 = vand.u32 %v31, 4294901760
  %561 = vmatpush.msra.mxu0 %v560
  %v562 = vand.u32 %v30, 4294901760
  %563 = vmatpush.msra.mxu0 %v562
  %v564 = vand.u32 %v29, 4294901760
  %565 = vmatpush.msra.mxu0 %v564
  %v566 = vand.u32 %v28, 4294901760
  %567 = vmatpush.msra.mxu0 %v566
  %v568 = vand.u32 %v27, 4294901760
  %569 = vmatpush.msra.mxu0 %v568
  %v570 = vand.u32 %v26, 4294901760
  %571 = vmatpush.msra.mxu0 %v570
  %v572 = vand.u32 %v25, 4294901760
  %573 = vmatpush.msra.mxu0 %v572
  %v574 = vand.u32 %v24, 4294901760
  %575 = vmatpush.msra.mxu0 %v574
  %v576 = vand.u32 %v23, 4294901760
  %577 = vmatpush.msra.mxu0 %v576
  %v578 = vand.u32 %v22, 4294901760
  %579 = vmatpush.msra.mxu0 %v578
  %v580 = vand.u32 %v21, 4294901760
  %581 = vmatpush.msra.mxu0 %v580
  %v582 = vand.u32 %v20, 4294901760
  %583 = vmatpush.msra.mxu0 %v582
  %v584 = vand.u32 %v301, 4294901760
  %v585 = vsub.f32 %v301, %v584
  %v586 = vand.u32 %v585, 4294901760
  %587 = vmatmul.f32.gmra.mxu0 %v586
  %v588 = vpop.f32.mrf.mxu0
  %v589 = vadd.f32 %v535, %v588
  %v590 = vand.u32 %v302, 4294901760
  %v591 = vsub.f32 %v302, %v590
  %v592 = vand.u32 %v591, 4294901760
  %593 = vmatmul.f32.gmra.mxu0 %v592
  %v594 = vpop.f32.mrf.mxu0
  %v595 = vadd.f32 %v540, %v594
  %v596 = vand.u32 %v303, 4294901760
  %v597 = vsub.f32 %v303, %v596
  %v598 = vand.u32 %v597, 4294901760
  %599 = vmatmul.f32.gmra.mxu0 %v598
  %v600 = vpop.f32.mrf.mxu0
  %v601 = vadd.f32 %v545, %v600
  %v602 = vand.u32 %v304, 4294901760
  %v603 = vsub.f32 %v304, %v602
  %v604 = vand.u32 %v603, 4294901760
  %605 = vmatmul.f32.gmra.mxu0 %v604
  %v606 = vpop.f32.mrf.mxu0
  %v607 = vadd.f32 %v550, %v606
  %608 = vdwg.mxu0
  %v609 = vand.u32 %v35, 4294901760
  %v610 = vsub.f32 %v35, %v609
  %v611 = vand.u32 %v610, 4294901760
  %612 = vmatpush.msra.mxu0 %v611
  %v613 = vand.u32 %v34, 4294901760
  %v614 = vsub.f32 %v34, %v613
  %v615 = vand.u32 %v614, 4294901760
  %616 = vmatpush.msra.mxu0 %v615
  %v617 = vand.u32 %v33, 4294901760
  %v618 = vsub.f32 %v33, %v617
  %v619 = vand.u32 %v618, 4294901760
  %620 = vmatpush.msra.mxu0 %v619
  %v621 = vand.u32 %v32, 4294901760
  %v622 = vsub.f32 %v32, %v621
  %v623 = vand.u32 %v622, 4294901760
  %624 = vmatpush.msra.mxu0 %v623
  %v625 = vand.u32 %v31, 4294901760
  %v626 = vsub.f32 %v31, %v625
  %v627 = vand.u32 %v626, 4294901760
  %628 = vmatpush.msra.mxu0 %v627
  %v629 = vand.u32 %v30, 4294901760
  %v630 = vsub.f32 %v30, %v629
  %v631 = vand.u32 %v630, 4294901760
  %632 = vmatpush.msra.mxu0 %v631
  %v633 = vand.u32 %v29, 4294901760
  %v634 = vsub.f32 %v29, %v633
  %v635 = vand.u32 %v634, 4294901760
  %636 = vmatpush.msra.mxu0 %v635
  %v637 = vand.u32 %v28, 4294901760
  %v638 = vsub.f32 %v28, %v637
  %v639 = vand.u32 %v638, 4294901760
  %640 = vmatpush.msra.mxu0 %v639
  %v641 = vand.u32 %v27, 4294901760
  %v642 = vsub.f32 %v27, %v641
  %v643 = vand.u32 %v642, 4294901760
  %644 = vmatpush.msra.mxu0 %v643
  %v645 = vand.u32 %v26, 4294901760
  %v646 = vsub.f32 %v26, %v645
  %v647 = vand.u32 %v646, 4294901760
  %648 = vmatpush.msra.mxu0 %v647
  %v649 = vand.u32 %v25, 4294901760
  %v650 = vsub.f32 %v25, %v649
  %v651 = vand.u32 %v650, 4294901760
  %652 = vmatpush.msra.mxu0 %v651
  %v653 = vand.u32 %v24, 4294901760
  %v654 = vsub.f32 %v24, %v653
  %v655 = vand.u32 %v654, 4294901760
  %656 = vmatpush.msra.mxu0 %v655
  %v657 = vand.u32 %v23, 4294901760
  %v658 = vsub.f32 %v23, %v657
  %v659 = vand.u32 %v658, 4294901760
  %660 = vmatpush.msra.mxu0 %v659
  %v661 = vand.u32 %v22, 4294901760
  %v662 = vsub.f32 %v22, %v661
  %v663 = vand.u32 %v662, 4294901760
  %664 = vmatpush.msra.mxu0 %v663
  %v665 = vand.u32 %v21, 4294901760
  %v666 = vsub.f32 %v21, %v665
  %v667 = vand.u32 %v666, 4294901760
  %668 = vmatpush.msra.mxu0 %v667
  %v669 = vand.u32 %v20, 4294901760
  %v670 = vsub.f32 %v20, %v669
  %v671 = vand.u32 %v670, 4294901760
  %672 = vmatpush.msra.mxu0 %v671
  %v673 = vand.u32 %v301, 4294901760
  %674 = vmatmul.f32.gmra.mxu0 %v673
  %v675 = vpop.f32.mrf.mxu0
  %v676 = vadd.f32 %v589, %v675
  %v677 = vand.u32 %v302, 4294901760
  %678 = vmatmul.f32.gmra.mxu0 %v677
  %v679 = vpop.f32.mrf.mxu0
  %v680 = vadd.f32 %v595, %v679
  %v681 = vand.u32 %v303, 4294901760
  %682 = vmatmul.f32.gmra.mxu0 %v681
  %v683 = vpop.f32.mrf.mxu0
  %v684 = vadd.f32 %v601, %v683
  %v685 = vand.u32 %v304, 4294901760
  %686 = vmatmul.f32.gmra.mxu0 %v685
  %v687 = vpop.f32.mrf.mxu0
  %v688 = vadd.f32 %v607, %v687
  %689 = vdwg.mxu0
  %v690 = vand.u32 %v35, 4294901760
  %691 = vmatpush.msra.mxu0 %v690
  %v692 = vand.u32 %v34, 4294901760
  %693 = vmatpush.msra.mxu0 %v692
  %v694 = vand.u32 %v33, 4294901760
  %695 = vmatpush.msra.mxu0 %v694
  %v696 = vand.u32 %v32, 4294901760
  %697 = vmatpush.msra.mxu0 %v696
  %v698 = vand.u32 %v31, 4294901760
  %699 = vmatpush.msra.mxu0 %v698
  %v700 = vand.u32 %v30, 4294901760
  %701 = vmatpush.msra.mxu0 %v700
  %v702 = vand.u32 %v29, 4294901760
  %703 = vmatpush.msra.mxu0 %v702
  %v704 = vand.u32 %v28, 4294901760
  %705 = vmatpush.msra.mxu0 %v704
  %v706 = vand.u32 %v27, 4294901760
  %707 = vmatpush.msra.mxu0 %v706
  %v708 = vand.u32 %v26, 4294901760
  %709 = vmatpush.msra.mxu0 %v708
  %v710 = vand.u32 %v25, 4294901760
  %711 = vmatpush.msra.mxu0 %v710
  %v712 = vand.u32 %v24, 4294901760
  %713 = vmatpush.msra.mxu0 %v712
  %v714 = vand.u32 %v23, 4294901760
  %715 = vmatpush.msra.mxu0 %v714
  %v716 = vand.u32 %v22, 4294901760
  %717 = vmatpush.msra.mxu0 %v716
  %v718 = vand.u32 %v21, 4294901760
  %719 = vmatpush.msra.mxu0 %v718
  %v720 = vand.u32 %v20, 4294901760
  %721 = vmatpush.msra.mxu0 %v720
  %v722 = vand.u32 %v301, 4294901760
  %723 = vmatmul.f32.gmra.mxu0 %v722
  %v724 = vpop.f32.mrf.mxu0
  %v725 = vadd.f32 %v676, %v724
  %v726 = vand.u32 %v302, 4294901760
  %727 = vmatmul.f32.gmra.mxu0 %v726
  %v728 = vpop.f32.mrf.mxu0
  %v729 = vadd.f32 %v680, %v728
  %v730 = vand.u32 %v303, 4294901760
  %731 = vmatmul.f32.gmra.mxu0 %v730
  %v732 = vpop.f32.mrf.mxu0
  %v733 = vadd.f32 %v684, %v732
  %v734 = vand.u32 %v304, 4294901760
  %735 = vmatmul.f32.gmra.mxu0 %v734
  %v736 = vpop.f32.mrf.mxu0
  %v737 = vadd.f32 %v688, %v736
  %738 = vdwg.mxu0
  %v739 = vsel %vm36, %v725, -inf
  %740 = vmax.xlane.f32.xlu0 %v739
  %v741 = vpop.xlane.xlu0 %740
  %v742 = vsel %vm36, %v729, -inf
  %743 = vmax.xlane.f32.xlu0 %v742
  %v744 = vpop.xlane.xlu0 %743
  %v745 = vsel %vm36, %v733, -inf
  %746 = vmax.xlane.f32.xlu0 %v745
  %v747 = vpop.xlane.xlu0 %746
  %v748 = vsel %vm36, %v737, -inf
  %749 = vmax.xlane.f32.xlu0 %v748
  %v750 = vpop.xlane.xlu0 %749
  %v751 = vsub.f32 %v725, %v741
  %v752 = vsub.f32 %v729, %v744
  %v753 = vsub.f32 %v733, %v747
  %v754 = vsub.f32 %v737, %v750
  %v755 = vmul.f32 %v751, 1.442695
  %v756 = vpow.pop %v755
  %v757 = vmul.f32 %v752, 1.442695
  %v758 = vpow.pop %v757
  %v759 = vmul.f32 %v753, 1.442695
  %v760 = vpow.pop %v759
  %v761 = vmul.f32 %v754, 1.442695
  %v762 = vpow.pop %v761
  %v763 = vsel %vm36, %v756, 0.0
  %764 = vadd.xlane.f32.xlu0 %v763
  %v765 = vpop.xlane.xlu0 %764
  %v766 = vsel %vm36, %v758, 0.0
  %767 = vadd.xlane.f32.xlu0 %v766
  %v768 = vpop.xlane.xlu0 %767
  %v769 = vsel %vm36, %v760, 0.0
  %770 = vadd.xlane.f32.xlu0 %v769
  %v771 = vpop.xlane.xlu0 %770
  %v772 = vsel %vm36, %v762, 0.0
  %773 = vadd.xlane.f32.xlu0 %v772
  %v774 = vpop.xlane.xlu0 %773
  %v775 = vlog2.pop %v765
  %v776 = vmul.f32 %v775, 0.6931472
  %v777 = vlog2.pop %v768
  %v778 = vmul.f32 %v777, 0.6931472
  %v779 = vlog2.pop %v771
  %v780 = vmul.f32 %v779, 0.6931472
  %v781 = vlog2.pop %v774
  %v782 = vmul.f32 %v781, 0.6931472
  %v783 = vadd.f32 %v741, %v776
  %v784 = vadd.f32 %v744, %v778
  %v785 = vadd.f32 %v747, %v780
  %v786 = vadd.f32 %v750, %v782
  %v787 = vsub.f32 %v725, %v783
  %v788 = vsub.f32 %v729, %v784
  %v789 = vsub.f32 %v733, %v785
  %v790 = vsub.f32 %v737, %v786
  %791 = vst.msk [vmem:[%s3] sm:$0xff] %vm36, %v787
  %792 = vst.msk [vmem:[%s3 + $0x8] sm:$0xff] %vm36, %v788
  %793 = vst.msk [vmem:[%s3 + $0x10] sm:$0xff] %vm36, %v789
  %794 = vst.msk [vmem:[%s3 + $0x18] sm:$0xff] %vm36, %v790
  // Predicated region
  $region14: #{tpu_custom_call.1} parent=0 // pred_check
    _
  $region15: #{tpu_custom_call.1} parent=0 // pred_check_branch
    %796 = sbr.rel (0) target = $region17
  $region16: #{tpu_custom_call.1} parent=0 // pred_region
    _
  $region17: #{tpu_custom_call.1} parent=0 // pred_fallthru
    _
  // Predicated region
  $region18: #{tpu_custom_call.1} parent=0 // pred_check
    _
  $region19: #{tpu_custom_call.1} parent=0 // pred_check_branch
    %798 = sbr.rel (0) target = $region21
  $region20: #{tpu_custom_call.1} parent=0 // pred_region
    _
  $region21: #{tpu_custom_call.1} parent=0 // pred_fallthru
    _

</llo_original>
